<compile_context>
chip_gen: v7x
topology: tpu7x:2x2x1
jax: 0.10.0
libtpu: 0.0.40
codegen_flags: <defaults>
</compile_context>

<pallas_src>
from functools import partial

import jax
import jax.numpy as jnp
from jax.scipy.special import logsumexp
from jax.experimental import pallas as pl
from jax.experimental.pallas import tpu as pltpu


# ----------------------------------------------------------------------------
# Device-aware sizing helpers
# ----------------------------------------------------------------------------
def _vmem_capacity_bytes():
    try:
        return int(pltpu.get_tpu_info().vmem_capacity_bytes)
    except Exception:
        return 128 * 1024 * 1024  # v5e/v6e default


def _choose_tile_l(C, Tp, out_bytes, store_tracks):
    """Largest 128-multiple L tile whose double-buffered streams fit VMEM."""
    vmem = _vmem_capacity_bytes()
    weight_bytes = 2 * (3 * Tp) * C * 4          # packed weights, double-buffered
    budget = int(vmem * 0.40) - weight_bytes
    # Bytes per L column per pass (x2 for double buffering), worst of A / B.
    col_a = C * 4 + (2 * Tp * 4 if store_tracks else 0)
    col_b = (2 * Tp * 4 if store_tracks else C * 4) + 3 * Tp * out_bytes
    per_col = 2 * max(col_a, col_b)
    t = budget // max(per_col, 1)
    t = (t // 128) * 128
    return int(min(max(t, 512), 8192))


# ----------------------------------------------------------------------------
# Pass A: packed projection + streaming logsumexp / pooled-mix partial stats
# ----------------------------------------------------------------------------
def _make_stats_kernel(Tp, L_true, tile_l, tpc, store_tracks, ragged):
    def kernel(x_ref, w_ref, *out_refs):
        if store_tracks:
            raw_t_ref, raw_c_ref, m_t, s_t, m_c, s_c, d_sum = out_refs
        else:
            m_t, s_t, m_c, s_c, d_sum = out_refs
        c = pl.program_id(1)
        l = pl.program_id(2)

        @pl.when(l == 0)
        def _init():
            neg_inf = jnp.full((1, 1, Tp, 1), -jnp.inf, dtype=jnp.float32)
            zero = jnp.zeros((1, 1, Tp, 1), dtype=jnp.float32)
            m_t[...] = neg_inf
            m_c[...] = neg_inf
            s_t[...] = zero
            s_c[...] = zero
            d_sum[...] = zero

        x = x_ref[0]                                            # (C, tile_l)
        # One MXU pass covers head_target, head_control and the mix projection.
        y = jnp.dot(w_ref[...], x, preferred_element_type=jnp.float32)  # (3Tp, tile_l)
        tt = y[0:Tp]
        tc = y[Tp:2 * Tp]
        dx = y[2 * Tp:3 * Tp]

        if store_tracks:
            # Ragged last tile: OOB columns are masked on store by Pallas.
            raw_t_ref[0] = tt
            raw_c_ref[0] = tc

        if ragged:
            col = (jax.lax.broadcasted_iota(jnp.int32, (Tp, tile_l), 1)
                   + (c * tpc + l) * tile_l)
            valid = col < L_true
            tt = jnp.where(valid, tt, -jnp.inf)
            tc = jnp.where(valid, tc, -jnp.inf)
            dx = jnp.where(valid, dx, 0.0)   # x is not zero padded any more

        def online_lse(z, m_ref, s_ref):
            m_old = m_ref[0, 0]
            m_new = jnp.maximum(m_old, jnp.max(z, axis=-1, keepdims=True))
            m_new = jnp.maximum(m_new, -1e30)   # guard: all-masked tile -> no NaN
            s_ref[0, 0] = (s_ref[0, 0] * jnp.exp(m_old - m_new)
                           + jnp.sum(jnp.exp(z - m_new), axis=-1, keepdims=True))
            m_ref[0, 0] = m_new

        online_lse(tt, m_t, s_t)
        online_lse(tc, m_c, s_c)
        # AdaptiveAvgPool1d(1) + dense fused into the same matmul:
        # mean_L(wd @ x) == (wd @ sum_L x) / L; bias + /L applied in the wrapper.
        d_sum[0, 0] = d_sum[0, 0] + jnp.sum(dx, axis=-1, keepdims=True)

    return kernel


# ----------------------------------------------------------------------------
# Pass B: normalize tracks and compute the 2-way logsumexp mix
# ----------------------------------------------------------------------------
def _mix_store(tt, tc, lse_t, lse_c, a_shift, target_ref, control_ref, total_ref,
               out_dtype):
    tn = tt - lse_t                              # (Tp, tile_l)
    cn = tc - lse_c
    a = tt + a_shift                             # == tn + mix  (a_shift = mix - lse_t)
    d = jnp.abs(a - cn)
    # logaddexp(a, cn) with one exp + one log per element (EUP-friendly, stable).
    total = jnp.maximum(a, cn) + jnp.log(1.0 + jnp.exp(-d))
    target_ref[0] = tn.astype(out_dtype)
    control_ref[0] = cn.astype(out_dtype)
    total_ref[0] = total.astype(out_dtype)


def _make_mix_kernel_recompute(Tp, out_dtype):
    def kernel(x_ref, w2_ref, lse_t_ref, lse_c_ref, ash_ref,
               target_ref, control_ref, total_ref):
        y = jnp.dot(w2_ref[...], x_ref[0], preferred_element_type=jnp.float32)
        _mix_store(y[0:Tp], y[Tp:2 * Tp], lse_t_ref[0], lse_c_ref[0], ash_ref[0],
                   target_ref, control_ref, total_ref, out_dtype)
    return kernel


def _make_mix_kernel_stored(out_dtype):
    def kernel(raw_t_ref, raw_c_ref, lse_t_ref, lse_c_ref, ash_ref,
               target_ref, control_ref, total_ref):
        _mix_store(raw_t_ref[0], raw_c_ref[0], lse_t_ref[0], lse_c_ref[0],
                   ash_ref[0], target_ref, control_ref, total_ref, out_dtype)
    return kernel


# ----------------------------------------------------------------------------
# Wrapper
# ----------------------------------------------------------------------------
@partial(jax.jit, static_argnames=("tile_l", "out_dtype", "force_store_tracks"))
def additive_mix(x, w_target, w_control, w_dense, b_dense, *,
                 tile_l=None, out_dtype=jnp.float32, force_store_tracks=None):
    """x: (B, C, L) f32.  Returns dict target/control/total (B,T,L), mix_coeff (B,T,1)."""
    B, C, L = x.shape
    T = w_target.shape[0]
    Tp = ((T + 7) // 8) * 8                      # sublane-aligned task count
    out_bytes = jnp.dtype(out_dtype).itemsize
    store_tracks = (C >= 4 * Tp) if force_store_tracks is None else bool(force_store_tracks)

    if tile_l is None:
        tile_l = _choose_tile_l(C, Tp, out_bytes, store_tracks)
    tile_l = int(tile_l)
    if tile_l >= L:
        tile_l = L                               # single tile: block == full dim
    else:
        tile_l = max(128, (tile_l // 128) * 128)  # lane-aligned tiles otherwise
    n_l = -(-L // tile_l)                        # ceil
    ragged = (L % tile_l) != 0

    # v7x dual-TensorCore: when B == 1, split L into 2 independent stat chunks.
    n_chunks = 2 if (B == 1 and n_l >= 2 and n_l % 2 == 0) else 1
    tpc = n_l // n_chunks

    def pad_rows(w):
        return jnp.pad(w, ((0, Tp - T), (0, 0)))

    # Packed weights: one MXU matmul covers both heads + the mix projection.
    w3 = jnp.concatenate([pad_rows(w_target), pad_rows(w_control),
                          pad_rows(w_dense)], axis=0)            # (3Tp, C)
    bd_p = jnp.pad(b_dense, ((0, Tp - T), (0, 0)))               # (Tp, 1)

    vmem_cap = _vmem_capacity_bytes()
    vmem_limit = int(min(vmem_cap * 3 // 4, 100 * 1024 * 1024))

    # ---- Pass A: stats (and optionally the raw tracks) ----------------------
    stat_shape = jax.ShapeDtypeStruct((B, n_chunks, Tp, 1), jnp.float32)
    stat_spec = pl.BlockSpec((1, 1, Tp, 1), lambda b, c, l: (b, c, 0, 0))
    x_spec_a = pl.BlockSpec((1, C, tile_l), lambda b, c, l: (b, 0, c * tpc + l))
    w3_spec = pl.BlockSpec((3 * Tp, C), lambda b, c, l: (0, 0))

    a_out_shapes = [stat_shape] * 5
    a_out_specs = [stat_spec] * 5
    if store_tracks:
        raw_shape = jax.ShapeDtypeStruct((B, Tp, L), jnp.float32)
        raw_spec = pl.BlockSpec((1, Tp, tile_l), lambda b, c, l: (b, 0, c * tpc + l))
        a_out_shapes = [raw_shape, raw_shape] + a_out_shapes
        a_out_specs = [raw_spec, raw_spec] + a_out_specs

    a_outs = pl.pallas_call(
        _make_stats_kernel(Tp, L, tile_l, tpc, store_tracks, ragged),
        out_shape=tuple(a_out_shapes),
        grid_spec=pltpu.PrefetchScalarGridSpec(
            num_scalar_prefetch=0,
            grid=(B, n_chunks, tpc),
            in_specs=[x_spec_a, w3_spec],
            out_specs=a_out_specs,
        ),
        compiler_params=pltpu.CompilerParams(
            dimension_semantics=("parallel", "parallel", "arbitrary"),
            vmem_limit_bytes=vmem_limit),
    )(x, w3)

    if store_tracks:
        raw_t, raw_c, m_t, s_t, m_c, s_c, d_sum = a_outs
    else:
        m_t, s_t, m_c, s_c, d_sum = a_outs

    # ---- Tiny chunk-combine + mix bias in plain JAX (B*Tp scalars) ----------
    lse_t = logsumexp(m_t + jnp.log(s_t), axis=1)                # (B, Tp, 1)
    lse_c = logsumexp(m_c + jnp.log(s_c), axis=1)
    mix_full = jnp.sum(d_sum, axis=1) * (1.0 / L) + bd_p         # (B, Tp, 1)
    a_shift = mix_full - lse_t                                   # (B, Tp, 1)

    # ---- Pass B: normalize + 2-way logsumexp mix -----------------------------
    out_track_shape = jax.ShapeDtypeStruct((B, T, L), out_dtype)
    out_track_spec = pl.BlockSpec((1, Tp, tile_l), lambda b, l: (b, 0, l))
    stat_in_spec = pl.BlockSpec((1, Tp, 1), lambda b, l: (b, 0, 0))

    if store_tracks:
        kernel_b = _make_mix_kernel_stored(out_dtype)
        track_in_spec = pl.BlockSpec((1, Tp, tile_l), lambda b, l: (b, 0, l))
        b_in_specs = [track_in_spec, track_in_spec,
                      stat_in_spec, stat_in_spec, stat_in_spec]
        b_inputs = (raw_t, raw_c, lse_t, lse_c, a_shift)
    else:
        kernel_b = _make_mix_kernel_recompute(Tp, out_dtype)
        w2 = w3[:2 * Tp]                                          # (2Tp, C)
        b_in_specs = [pl.BlockSpec((1, C, tile_l), lambda b, l: (b, 0, l)),
                      pl.BlockSpec((2 * Tp, C), lambda b, l: (0, 0)),
                      stat_in_spec, stat_in_spec, stat_in_spec]
        b_inputs = (x, w2, lse_t, lse_c, a_shift)

    target, control, total = pl.pallas_call(
        kernel_b,
        out_shape=(out_track_shape, out_track_shape, out_track_shape),
        grid_spec=pltpu.PrefetchScalarGridSpec(
            num_scalar_prefetch=0,
            grid=(B, n_l),
            in_specs=b_in_specs,
            out_specs=[out_track_spec] * 3,
        ),
        compiler_params=pltpu.CompilerParams(
            dimension_semantics=("parallel", "parallel"),
            vmem_limit_bytes=vmem_limit),
    )(*b_inputs)

    return {"target": target, "control": control, "total": total,
            "mix_coeff": mix_full[:, :T, :]}


# ----------------------------------------------------------------------------
# Pure-JAX reference mirroring the PyTorch forward
# ----------------------------------------------------------------------------
def _reference(x, w_target, w_control, w_dense, b_dense):
    tt = jnp.einsum("tc,bcl->btl", w_target, x)
    tc = jnp.einsum("tc,bcl->btl", w_control, x)
    pooled = jnp.mean(x, axis=-1)                                  # (B, C)
    mix = pooled @ w_dense.T + b_dense[:, 0]                       # (B, T)
    mix = mix[..., None]                                           # (B, T, 1)
    lse = lambda z: logsumexp(z, axis=-1, keepdims=True)
    tt_n = tt - lse(tt)
    tc_n = tc - lse(tc)
    total = jnp.logaddexp(mix + tt_n, tc_n)
    return {"target": tt_n, "control": tc_n, "total": total, "mix_coeff": mix}


if __name__ == "__main__":
    key = jax.random.PRNGKey(0)
    kx, kt, kc, kd, kb, kx2, kx3 = jax.random.split(key, 7)

    # Small shapes: batch=2, channels=4, length=16, num_tasks=4.
    B, C, L, T = 2, 4, 16, 4
    x = jax.random.normal(kx, (B, C, L), dtype=jnp.float32)
    # Conv1d(kernel_size=1, bias=False) weights: (out_ch, in_ch, 1) -> squeezed.
    w_target = jax.random.normal(kt, (T, C), dtype=jnp.float32) * 0.5
    w_control = jax.random.normal(kc, (T, C), dtype=jnp.float32) * 0.5
    # LazyLinear(num_tasks): weight (T, C), bias kept as (T, 1).
    w_dense = jax.random.normal(kd, (T, C), dtype=jnp.float32) * 0.5
    b_dense = jax.random.normal(kb, (T, 1), dtype=jnp.float32) * 0.1

    def check(out, ref, atol=1e-4, rtol=1e-4):
        for k in ("target", "control", "total", "mix_coeff"):
            assert out[k].shape == ref[k].shape, (k, out[k].shape, ref[k].shape)
            assert jnp.allclose(out[k].astype(jnp.float32), ref[k],
                                atol=atol, rtol=rtol), k

    # 1) Single-tile path (tile_l == L), recompute mode (C < 4*Tp).
    out = jax.block_until_ready(additive_mix(x, w_target, w_control, w_dense, b_dense))
    check(out, _reference(x, w_target, w_control, w_dense, b_dense))

    # 2) Tiled path with a ragged last L block (multi-tile online logsumexp).
    L2 = 200
    x2 = jax.random.normal(kx2, (B, C, L2), dtype=jnp.float32)
    ref2 = _reference(x2, w_target, w_control, w_dense, b_dense)
    out2 = jax.block_until_ready(
        additive_mix(x2, w_target, w_control, w_dense, b_dense, tile_l=128))
    check(out2, ref2)

    # 3) Store-tracks path (the C >= 4*Tp plan), forced to exercise it here.
    out3 = jax.block_until_ready(
        additive_mix(x2, w_target, w_control, w_dense, b_dense, tile_l=128,
                     force_store_tracks=True))
    check(out3, ref2)

    # 4) B == 1: L-chunked Pass A (v7x dual-core path) with wrapper combine.
    x3 = jax.random.normal(kx3, (1, C, 512), dtype=jnp.float32)
    out4 = jax.block_until_ready(
        additive_mix(x3, w_target, w_control, w_dense, b_dense, tile_l=128))
    check(out4, _reference(x3, w_target, w_control, w_dense, b_dense))

    # 5) bf16 output mode (in-kernel math stays f32; loose tolerance on cast).
    out5 = jax.block_until_ready(
        additive_mix(x2, w_target, w_control, w_dense, b_dense, tile_l=128,
                     out_dtype=jnp.bfloat16))
    for k in ("target", "control", "total"):
        assert out5[k].dtype == jnp.bfloat16, k
        assert jnp.allclose(out5[k].astype(jnp.float32), ref2[k],
                            atol=0.1, rtol=0.05), k

    print("KERNEL_OK")
</pallas_src>

<mosaic_0001>
module attributes {stable_mosaic.version = 11 : i64} {
  func.func @kernel(%arg0: i32, %arg1: i32, %arg2: i32, %arg3: memref<1x4x16xf32, #tpu.memory_space<vmem>>, %arg4: memref<24x4xf32, #tpu.memory_space<vmem>>, %arg5: memref<1x1x8x1xf32, #tpu.memory_space<vmem>>, %arg6: memref<1x1x8x1xf32, #tpu.memory_space<vmem>>, %arg7: memref<1x1x8x1xf32, #tpu.memory_space<vmem>>, %arg8: memref<1x1x8x1xf32, #tpu.memory_space<vmem>>, %arg9: memref<1x1x8x1xf32, #tpu.memory_space<vmem>>) attributes {dimension_semantics = [#tpu.dimension_semantics<parallel>, #tpu.dimension_semantics<parallel>, #tpu.dimension_semantics<arbitrary>], iteration_bounds = array<i64: 2, 1, 1>, scalar_prefetch = 0 : i64, scratch_operands = 0 : i64, tpu.core_type = #tpu.core_type<tc>, window_params = [{transform_indices = @transform_0, window_bounds = array<i64: 1, 4, 16>}, {pipeline_mode = #tpu.pipeline_mode<synchronous>, transform_indices = @transform_1, window_bounds = array<i64: 24, 4>}, {transform_indices = @transform_2, window_bounds = array<i64: 1, 1, 8, 1>}, {transform_indices = @transform_3, window_bounds = array<i64: 1, 1, 8, 1>}, {transform_indices = @transform_4, window_bounds = array<i64: 1, 1, 8, 1>}, {transform_indices = @transform_5, window_bounds = array<i64: 1, 1, 8, 1>}, {transform_indices = @transform_6, window_bounds = array<i64: 1, 1, 8, 1>}]} {
    %c0_i32 = arith.constant 0 : i32
    %0 = arith.cmpi eq, %arg2, %c0_i32 : i32
    %1 = arith.extui %0 : i1 to i32
    %c0_i32_0 = arith.constant 0 : i32
    %2 = arith.cmpi ne, %1, %c0_i32_0 : i32
    scf.if %2 {
      %cst_52 = arith.constant 0xFF800000 : f32
      %66 = vector.broadcast %cst_52 : f32 to vector<1x1x8x1xf32>
      %cst_53 = arith.constant 0.000000e+00 : f32
      %67 = vector.broadcast %cst_53 : f32 to vector<1x1x8x1xf32>
      %c0_54 = arith.constant 0 : index
      %c0_55 = arith.constant 0 : index
      %c0_56 = arith.constant 0 : index
      %c0_57 = arith.constant 0 : index
      %68 = vector.load %arg5[%c0_54, %c0_55, %c0_56, %c0_57] : memref<1x1x8x1xf32, #tpu.memory_space<vmem>>, vector<1x1x8x1xf32>
      tpu.vector_store %arg5[%c0_54, %c0_55, %c0_56, %c0_57], %66 {strides = array<i32>} : memref<1x1x8x1xf32, #tpu.memory_space<vmem>>, vector<1x1x8x1xf32>,
      %c0_58 = arith.constant 0 : index
      %c0_59 = arith.constant 0 : index
      %c0_60 = arith.constant 0 : index
      %c0_61 = arith.constant 0 : index
      %69 = vector.load %arg7[%c0_58, %c0_59, %c0_60, %c0_61] : memref<1x1x8x1xf32, #tpu.memory_space<vmem>>, vector<1x1x8x1xf32>
      tpu.vector_store %arg7[%c0_58, %c0_59, %c0_60, %c0_61], %66 {strides = array<i32>} : memref<1x1x8x1xf32, #tpu.memory_space<vmem>>, vector<1x1x8x1xf32>,
      %c0_62 = arith.constant 0 : index
      %c0_63 = arith.constant 0 : index
      %c0_64 = arith.constant 0 : index
      %c0_65 = arith.constant 0 : index
      %70 = vector.load %arg6[%c0_62, %c0_63, %c0_64, %c0_65] : memref<1x1x8x1xf32, #tpu.memory_space<vmem>>, vector<1x1x8x1xf32>
      tpu.vector_store %arg6[%c0_62, %c0_63, %c0_64, %c0_65], %67 {strides = array<i32>} : memref<1x1x8x1xf32, #tpu.memory_space<vmem>>, vector<1x1x8x1xf32>,
      %c0_66 = arith.constant 0 : index
      %c0_67 = arith.constant 0 : index
      %c0_68 = arith.constant 0 : index
      %c0_69 = arith.constant 0 : index
      %71 = vector.load %arg8[%c0_66, %c0_67, %c0_68, %c0_69] : memref<1x1x8x1xf32, #tpu.memory_space<vmem>>, vector<1x1x8x1xf32>
      tpu.vector_store %arg8[%c0_66, %c0_67, %c0_68, %c0_69], %67 {strides = array<i32>} : memref<1x1x8x1xf32, #tpu.memory_space<vmem>>, vector<1x1x8x1xf32>,
      %c0_70 = arith.constant 0 : index
      %c0_71 = arith.constant 0 : index
      %c0_72 = arith.constant 0 : index
      %c0_73 = arith.constant 0 : index
      %72 = vector.load %arg9[%c0_70, %c0_71, %c0_72, %c0_73] : memref<1x1x8x1xf32, #tpu.memory_space<vmem>>, vector<1x1x8x1xf32>
      tpu.vector_store %arg9[%c0_70, %c0_71, %c0_72, %c0_73], %67 {strides = array<i32>} : memref<1x1x8x1xf32, #tpu.memory_space<vmem>>, vector<1x1x8x1xf32>,
    } else {
    }
    %c0 = arith.constant 0 : index
    %c0_1 = arith.constant 0 : index
    %c0_2 = arith.constant 0 : index
    %3 = vector.load %arg3[%c0, %c0_1, %c0_2] : memref<1x4x16xf32, #tpu.memory_space<vmem>>, vector<1x4x16xf32>
    %4 = vector.shape_cast %3 : vector<1x4x16xf32> to vector<4x16xf32>
    %c0_3 = arith.constant 0 : index
    %c0_4 = arith.constant 0 : index
    %5 = vector.load %arg4[%c0_3, %c0_4] : memref<24x4xf32, #tpu.memory_space<vmem>>, vector<24x4xf32>
    %cst = arith.constant dense<0.000000e+00> : vector<24x16xf32>
    %6 = tpu.matmul %5, %4, %cst {dimension_numbers = #tpu.dot_dimension_numbers<[1], [0], [0], [1], [0, 0, 1, 1], [], []>} : vector<24x4xf32>, vector<4x16xf32>, vector<24x16xf32> -> vector<24x16xf32>
    %7 = vector.extract_strided_slice %6 {offsets = [0, 0], sizes = [8, 16], strides = [1, 1]} : vector<24x16xf32> to vector<8x16xf32>
    %8 = vector.extract_strided_slice %6 {offsets = [8, 0], sizes = [8, 16], strides = [1, 1]} : vector<24x16xf32> to vector<8x16xf32>
    %9 = vector.extract_strided_slice %6 {offsets = [16, 0], sizes = [8, 16], strides = [1, 1]} : vector<24x16xf32> to vector<8x16xf32>
    %c0_5 = arith.constant 0 : index
    %c0_6 = arith.constant 0 : index
    %c0_7 = arith.constant 0 : index
    %c0_8 = arith.constant 0 : index
    %10 = vector.load %arg5[%c0_5, %c0_6, %c0_7, %c0_8] : memref<1x1x8x1xf32, #tpu.memory_space<vmem>>, vector<1x1x8x1xf32>
    %11 = vector.shape_cast %10 : vector<1x1x8x1xf32> to vector<8x1xf32>
    %cst_9 = arith.constant dense<0xFF800000> : vector<8xf32>
    %12 = vector.multi_reduction <maximumf>, %7, %cst_9 [1] : vector<8x16xf32> to vector<8xf32>
    %13 = vector.shape_cast %12 : vector<8xf32> to vector<8x1xf32>
    %14 = arith.maximumf %11, %13 : vector<8x1xf32>
    %cst_10 = arith.constant -1.000000e+30 : f32
    %15 = vector.broadcast %cst_10 : f32 to vector<8x1xf32>
    %16 = arith.maximumf %14, %15 : vector<8x1xf32>
    %c0_11 = arith.constant 0 : index
    %c0_12 = arith.constant 0 : index
    %c0_13 = arith.constant 0 : index
    %c0_14 = arith.constant 0 : index
    %17 = vector.load %arg6[%c0_11, %c0_12, %c0_13, %c0_14] : memref<1x1x8x1xf32, #tpu.memory_space<vmem>>, vector<1x1x8x1xf32>
    %18 = vector.shape_cast %17 : vector<1x1x8x1xf32> to vector<8x1xf32>
    %19 = arith.subf %11, %16 : vector<8x1xf32>
    %20 = math.exp %19 : vector<8x1xf32>
    %21 = arith.mulf %18, %20 : vector<8x1xf32>
    %22 = vector.broadcast %16 : vector<8x1xf32> to vector<8x16xf32>
    %23 = arith.subf %7, %22 : vector<8x16xf32>
    %24 = math.exp %23 : vector<8x16xf32>
    %cst_15 = arith.constant dense<0.000000e+00> : vector<8xf32>
    %25 = vector.multi_reduction <add>, %24, %cst_15 [1] : vector<8x16xf32> to vector<8xf32>
    %26 = vector.shape_cast %25 : vector<8xf32> to vector<8x1xf32>
    %27 = arith.addf %21, %26 : vector<8x1xf32>
    %c0_16 = arith.constant 0 : index
    %c0_17 = arith.constant 0 : index
    %c0_18 = arith.constant 0 : index
    %c0_19 = arith.constant 0 : index
    %28 = vector.load %arg6[%c0_16, %c0_17, %c0_18, %c0_19] : memref<1x1x8x1xf32, #tpu.memory_space<vmem>>, vector<1x1x8x1xf32>
    %29 = vector.shape_cast %28 : vector<1x1x8x1xf32> to vector<8x1xf32>
    %30 = vector.shape_cast %27 : vector<8x1xf32> to vector<1x1x8x1xf32>
    tpu.vector_store %arg6[%c0_16, %c0_17, %c0_18, %c0_19], %30 {strides = array<i32>} : memref<1x1x8x1xf32, #tpu.memory_space<vmem>>, vector<1x1x8x1xf32>,
    %c0_20 = arith.constant 0 : index
    %c0_21 = arith.constant 0 : index
    %c0_22 = arith.constant 0 : index
    %c0_23 = arith.constant 0 : index
    %31 = vector.load %arg5[%c0_20, %c0_21, %c0_22, %c0_23] : memref<1x1x8x1xf32, #tpu.memory_space<vmem>>, vector<1x1x8x1xf32>
    %32 = vector.shape_cast %31 : vector<1x1x8x1xf32> to vector<8x1xf32>
    %33 = vector.shape_cast %16 : vector<8x1xf32> to vector<1x1x8x1xf32>
    tpu.vector_store %arg5[%c0_20, %c0_21, %c0_22, %c0_23], %33 {strides = array<i32>} : memref<1x1x8x1xf32, #tpu.memory_space<vmem>>, vector<1x1x8x1xf32>,
    %c0_24 = arith.constant 0 : index
    %c0_25 = arith.constant 0 : index
    %c0_26 = arith.constant 0 : index
    %c0_27 = arith.constant 0 : index
    %34 = vector.load %arg7[%c0_24, %c0_25, %c0_26, %c0_27] : memref<1x1x8x1xf32, #tpu.memory_space<vmem>>, vector<1x1x8x1xf32>
    %35 = vector.shape_cast %34 : vector<1x1x8x1xf32> to vector<8x1xf32>
    %cst_28 = arith.constant dense<0xFF800000> : vector<8xf32>
    %36 = vector.multi_reduction <maximumf>, %8, %cst_28 [1] : vector<8x16xf32> to vector<8xf32>
    %37 = vector.shape_cast %36 : vector<8xf32> to vector<8x1xf32>
    %38 = arith.maximumf %35, %37 : vector<8x1xf32>
    %cst_29 = arith.constant -1.000000e+30 : f32
    %39 = vector.broadcast %cst_29 : f32 to vector<8x1xf32>
    %40 = arith.maximumf %38, %39 : vector<8x1xf32>
    %c0_30 = arith.constant 0 : index
    %c0_31 = arith.constant 0 : index
    %c0_32 = arith.constant 0 : index
    %c0_33 = arith.constant 0 : index
    %41 = vector.load %arg8[%c0_30, %c0_31, %c0_32, %c0_33] : memref<1x1x8x1xf32, #tpu.memory_space<vmem>>, vector<1x1x8x1xf32>
    %42 = vector.shape_cast %41 : vector<1x1x8x1xf32> to vector<8x1xf32>
    %43 = arith.subf %35, %40 : vector<8x1xf32>
    %44 = math.exp %43 : vector<8x1xf32>
    %45 = arith.mulf %42, %44 : vector<8x1xf32>
    %46 = vector.broadcast %40 : vector<8x1xf32> to vector<8x16xf32>
    %47 = arith.subf %8, %46 : vector<8x16xf32>
    %48 = math.exp %47 : vector<8x16xf32>
    %cst_34 = arith.constant dense<0.000000e+00> : vector<8xf32>
    %49 = vector.multi_reduction <add>, %48, %cst_34 [1] : vector<8x16xf32> to vector<8xf32>
    %50 = vector.shape_cast %49 : vector<8xf32> to vector<8x1xf32>
    %51 = arith.addf %45, %50 : vector<8x1xf32>
    %c0_35 = arith.constant 0 : index
    %c0_36 = arith.constant 0 : index
    %c0_37 = arith.constant 0 : index
    %c0_38 = arith.constant 0 : index
    %52 = vector.load %arg8[%c0_35, %c0_36, %c0_37, %c0_38] : memref<1x1x8x1xf32, #tpu.memory_space<vmem>>, vector<1x1x8x1xf32>
    %53 = vector.shape_cast %52 : vector<1x1x8x1xf32> to vector<8x1xf32>
    %54 = vector.shape_cast %51 : vector<8x1xf32> to vector<1x1x8x1xf32>
    tpu.vector_store %arg8[%c0_35, %c0_36, %c0_37, %c0_38], %54 {strides = array<i32>} : memref<1x1x8x1xf32, #tpu.memory_space<vmem>>, vector<1x1x8x1xf32>,
    %c0_39 = arith.constant 0 : index
    %c0_40 = arith.constant 0 : index
    %c0_41 = arith.constant 0 : index
    %c0_42 = arith.constant 0 : index
    %55 = vector.load %arg7[%c0_39, %c0_40, %c0_41, %c0_42] : memref<1x1x8x1xf32, #tpu.memory_space<vmem>>, vector<1x1x8x1xf32>
    %56 = vector.shape_cast %55 : vector<1x1x8x1xf32> to vector<8x1xf32>
    %57 = vector.shape_cast %40 : vector<8x1xf32> to vector<1x1x8x1xf32>
    tpu.vector_store %arg7[%c0_39, %c0_40, %c0_41, %c0_42], %57 {strides = array<i32>} : memref<1x1x8x1xf32, #tpu.memory_space<vmem>>, vector<1x1x8x1xf32>,
    %c0_43 = arith.constant 0 : index
    %c0_44 = arith.constant 0 : index
    %c0_45 = arith.constant 0 : index
    %c0_46 = arith.constant 0 : index
    %58 = vector.load %arg9[%c0_43, %c0_44, %c0_45, %c0_46] : memref<1x1x8x1xf32, #tpu.memory_space<vmem>>, vector<1x1x8x1xf32>
    %59 = vector.shape_cast %58 : vector<1x1x8x1xf32> to vector<8x1xf32>
    %cst_47 = arith.constant dense<0.000000e+00> : vector<8xf32>
    %60 = vector.multi_reduction <add>, %9, %cst_47 [1] : vector<8x16xf32> to vector<8xf32>
    %61 = vector.shape_cast %60 : vector<8xf32> to vector<8x1xf32>
    %62 = arith.addf %59, %61 : vector<8x1xf32>
    %c0_48 = arith.constant 0 : index
    %c0_49 = arith.constant 0 : index
    %c0_50 = arith.constant 0 : index
    %c0_51 = arith.constant 0 : index
    %63 = vector.load %arg9[%c0_48, %c0_49, %c0_50, %c0_51] : memref<1x1x8x1xf32, #tpu.memory_space<vmem>>, vector<1x1x8x1xf32>
    %64 = vector.shape_cast %63 : vector<1x1x8x1xf32> to vector<8x1xf32>
    %65 = vector.shape_cast %62 : vector<8x1xf32> to vector<1x1x8x1xf32>
    tpu.vector_store %arg9[%c0_48, %c0_49, %c0_50, %c0_51], %65 {strides = array<i32>} : memref<1x1x8x1xf32, #tpu.memory_space<vmem>>, vector<1x1x8x1xf32>,
    return
  }
  func.func @transform_0(%arg0: i32, %arg1: i32, %arg2: i32) -> (i32, i32, i32) {
    %c1_i32 = arith.constant 1 : i32
    %0 = arith.muli %arg1, %c1_i32 : i32
    %1 = arith.addi %0, %arg2 : i32
    %c0_i32 = arith.constant 0 : i32
    %c0_i32_0 = arith.constant 0 : i32
    return %arg0, %c0_i32, %1 : i32, i32, i32
  }
  func.func @transform_1(%arg0: i32, %arg1: i32, %arg2: i32) -> (i32, i32) {
    %c0_i32 = arith.constant 0 : i32
    %c0_i32_0 = arith.constant 0 : i32
    %c0_i32_1 = arith.constant 0 : i32
    return %c0_i32, %c0_i32_0 : i32, i32
  }
  func.func @transform_2(%arg0: i32, %arg1: i32, %arg2: i32) -> (i32, i32, i32, i32) {
    %c0_i32 = arith.constant 0 : i32
    %c0_i32_0 = arith.constant 0 : i32
    %c0_i32_1 = arith.constant 0 : i32
    return %arg0, %arg1, %c0_i32, %c0_i32_0 : i32, i32, i32, i32
  }
  func.func @transform_3(%arg0: i32, %arg1: i32, %arg2: i32) -> (i32, i32, i32, i32) {
    %c0_i32 = arith.constant 0 : i32
    %c0_i32_0 = arith.constant 0 : i32
    %c0_i32_1 = arith.constant 0 : i32
    return %arg0, %arg1, %c0_i32, %c0_i32_0 : i32, i32, i32, i32
  }
  func.func @transform_4(%arg0: i32, %arg1: i32, %arg2: i32) -> (i32, i32, i32, i32) {
    %c0_i32 = arith.constant 0 : i32
    %c0_i32_0 = arith.constant 0 : i32
    %c0_i32_1 = arith.constant 0 : i32
    return %arg0, %arg1, %c0_i32, %c0_i32_0 : i32, i32, i32, i32
  }
  func.func @transform_5(%arg0: i32, %arg1: i32, %arg2: i32) -> (i32, i32, i32, i32) {
    %c0_i32 = arith.constant 0 : i32
    %c0_i32_0 = arith.constant 0 : i32
    %c0_i32_1 = arith.constant 0 : i32
    return %arg0, %arg1, %c0_i32, %c0_i32_0 : i32, i32, i32, i32
  }
  func.func @transform_6(%arg0: i32, %arg1: i32, %arg2: i32) -> (i32, i32, i32, i32) {
    %c0_i32 = arith.constant 0 : i32
    %c0_i32_0 = arith.constant 0 : i32
    %c0_i32_1 = arith.constant 0 : i32
    return %arg0, %arg1, %c0_i32, %c0_i32_0 : i32, i32, i32, i32
  }
}

module attributes {stable_mosaic.version = 11 : i64} {
  func.func @kernel(%arg0: i32, %arg1: i32, %arg2: memref<1x4x16xf32, #tpu.memory_space<vmem>>, %arg3: memref<16x4xf32, #tpu.memory_space<vmem>>, %arg4: memref<1x8x1xf32, #tpu.memory_space<vmem>>, %arg5: memref<1x8x1xf32, #tpu.memory_space<vmem>>, %arg6: memref<1x8x1xf32, #tpu.memory_space<vmem>>, %arg7: memref<1x8x16xf32, #tpu.memory_space<vmem>>, %arg8: memref<1x8x16xf32, #tpu.memory_space<vmem>>, %arg9: memref<1x8x16xf32, #tpu.memory_space<vmem>>) attributes {dimension_semantics = [#tpu.dimension_semantics<parallel>, #tpu.dimension_semantics<parallel>], iteration_bounds = array<i64: 2, 1>, scalar_prefetch = 0 : i64, scratch_operands = 0 : i64, tpu.core_type = #tpu.core_type<tc>, window_params = [{transform_indices = @transform_0, window_bounds = array<i64: 1, 4, 16>}, {pipeline_mode = #tpu.pipeline_mode<synchronous>, transform_indices = @transform_1, window_bounds = array<i64: 16, 4>}, {transform_indices = @transform_2, window_bounds = array<i64: 1, 8, 1>}, {transform_indices = @transform_3, window_bounds = array<i64: 1, 8, 1>}, {transform_indices = @transform_4, window_bounds = array<i64: 1, 8, 1>}, {transform_indices = @transform_5, window_bounds = array<i64: 1, 8, 16>}, {transform_indices = @transform_6, window_bounds = array<i64: 1, 8, 16>}, {transform_indices = @transform_7, window_bounds = array<i64: 1, 8, 16>}]} {
    %c0 = arith.constant 0 : index
    %c0_0 = arith.constant 0 : index
    %0 = vector.load %arg3[%c0, %c0_0] : memref<16x4xf32, #tpu.memory_space<vmem>>, vector<16x4xf32>
    %c0_1 = arith.constant 0 : index
    %c0_2 = arith.constant 0 : index
    %c0_3 = arith.constant 0 : index
    %1 = vector.load %arg2[%c0_1, %c0_2, %c0_3] : memref<1x4x16xf32, #tpu.memory_space<vmem>>, vector<1x4x16xf32>
    %2 = vector.shape_cast %1 : vector<1x4x16xf32> to vector<4x16xf32>
    %cst = arith.constant dense<0.000000e+00> : vector<16x16xf32>
    %3 = tpu.matmul %0, %2, %cst {dimension_numbers = #tpu.dot_dimension_numbers<[1], [0], [0], [1], [0, 0, 1, 1], [], []>} : vector<16x4xf32>, vector<4x16xf32>, vector<16x16xf32> -> vector<16x16xf32>
    %4 = vector.extract_strided_slice %3 {offsets = [0, 0], sizes = [8, 16], strides = [1, 1]} : vector<16x16xf32> to vector<8x16xf32>
    %5 = vector.extract_strided_slice %3 {offsets = [8, 0], sizes = [8, 16], strides = [1, 1]} : vector<16x16xf32> to vector<8x16xf32>
    %c0_4 = arith.constant 0 : index
    %c0_5 = arith.constant 0 : index
    %c0_6 = arith.constant 0 : index
    %6 = vector.load %arg4[%c0_4, %c0_5, %c0_6] : memref<1x8x1xf32, #tpu.memory_space<vmem>>, vector<1x8x1xf32>
    %7 = vector.shape_cast %6 : vector<1x8x1xf32> to vector<8x1xf32>
    %c0_7 = arith.constant 0 : index
    %c0_8 = arith.constant 0 : index
    %c0_9 = arith.constant 0 : index
    %8 = vector.load %arg5[%c0_7, %c0_8, %c0_9] : memref<1x8x1xf32, #tpu.memory_space<vmem>>, vector<1x8x1xf32>
    %9 = vector.shape_cast %8 : vector<1x8x1xf32> to vector<8x1xf32>
    %c0_10 = arith.constant 0 : index
    %c0_11 = arith.constant 0 : index
    %c0_12 = arith.constant 0 : index
    %10 = vector.load %arg6[%c0_10, %c0_11, %c0_12] : memref<1x8x1xf32, #tpu.memory_space<vmem>>, vector<1x8x1xf32>
    %11 = vector.shape_cast %10 : vector<1x8x1xf32> to vector<8x1xf32>
    %12 = vector.broadcast %7 : vector<8x1xf32> to vector<8x16xf32>
    %13 = arith.subf %4, %12 : vector<8x16xf32>
    %14 = vector.broadcast %9 : vector<8x1xf32> to vector<8x16xf32>
    %15 = arith.subf %5, %14 : vector<8x16xf32>
    %16 = vector.broadcast %11 : vector<8x1xf32> to vector<8x16xf32>
    %17 = arith.addf %4, %16 : vector<8x16xf32>
    %18 = arith.subf %17, %15 : vector<8x16xf32>
    %19 = math.absf %18 : vector<8x16xf32>
    %20 = arith.maximumf %17, %15 : vector<8x16xf32>
    %cst_13 = arith.constant 0.000000e+00 : f32
    %21 = vector.broadcast %cst_13 : f32 to vector<8x16xf32>
    %22 = arith.subf %21, %19 : vector<8x16xf32>
    %23 = math.exp %22 : vector<8x16xf32>
    %cst_14 = arith.constant 1.000000e+00 : f32
    %24 = vector.broadcast %cst_14 : f32 to vector<8x16xf32>
    %25 = arith.addf %24, %23 : vector<8x16xf32>
    %26 = math.log %25 : vector<8x16xf32>
    %27 = arith.addf %20, %26 : vector<8x16xf32>
    %c0_15 = arith.constant 0 : index
    %c0_16 = arith.constant 0 : index
    %c0_17 = arith.constant 0 : index
    %28 = vector.load %arg7[%c0_15, %c0_16, %c0_17] : memref<1x8x16xf32, #tpu.memory_space<vmem>>, vector<1x8x16xf32>
    %29 = vector.shape_cast %28 : vector<1x8x16xf32> to vector<8x16xf32>
    %30 = vector.shape_cast %13 : vector<8x16xf32> to vector<1x8x16xf32>
    tpu.vector_store %arg7[%c0_15, %c0_16, %c0_17], %30 {strides = array<i32>} : memref<1x8x16xf32, #tpu.memory_space<vmem>>, vector<1x8x16xf32>,
    %c0_18 = arith.constant 0 : index
    %c0_19 = arith.constant 0 : index
    %c0_20 = arith.constant 0 : index
    %31 = vector.load %arg8[%c0_18, %c0_19, %c0_20] : memref<1x8x16xf32, #tpu.memory_space<vmem>>, vector<1x8x16xf32>
    %32 = vector.shape_cast %31 : vector<1x8x16xf32> to vector<8x16xf32>
    %33 = vector.shape_cast %15 : vector<8x16xf32> to vector<1x8x16xf32>
    tpu.vector_store %arg8[%c0_18, %c0_19, %c0_20], %33 {strides = array<i32>} : memref<1x8x16xf32, #tpu.memory_space<vmem>>, vector<1x8x16xf32>,
    %c0_21 = arith.constant 0 : index
    %c0_22 = arith.constant 0 : index
    %c0_23 = arith.constant 0 : index
    %34 = vector.load %arg9[%c0_21, %c0_22, %c0_23] : memref<1x8x16xf32, #tpu.memory_space<vmem>>, vector<1x8x16xf32>
    %35 = vector.shape_cast %34 : vector<1x8x16xf32> to vector<8x16xf32>
    %36 = vector.shape_cast %27 : vector<8x16xf32> to vector<1x8x16xf32>
    tpu.vector_store %arg9[%c0_21, %c0_22, %c0_23], %36 {strides = array<i32>} : memref<1x8x16xf32, #tpu.memory_space<vmem>>, vector<1x8x16xf32>,
    return
  }
  func.func @transform_0(%arg0: i32, %arg1: i32) -> (i32, i32, i32) {
    %c0_i32 = arith.constant 0 : i32
    %c0_i32_0 = arith.constant 0 : i32
    return %arg0, %c0_i32, %arg1 : i32, i32, i32
  }
  func.func @transform_1(%arg0: i32, %arg1: i32) -> (i32, i32) {
    %c0_i32 = arith.constant 0 : i32
    %c0_i32_0 = arith.constant 0 : i32
    %c0_i32_1 = arith.constant 0 : i32
    return %c0_i32, %c0_i32_0 : i32, i32
  }
  func.func @transform_2(%arg0: i32, %arg1: i32) -> (i32, i32, i32) {
    %c0_i32 = arith.constant 0 : i32
    %c0_i32_0 = arith.constant 0 : i32
    %c0_i32_1 = arith.constant 0 : i32
    return %arg0, %c0_i32, %c0_i32_0 : i32, i32, i32
  }
  func.func @transform_3(%arg0: i32, %arg1: i32) -> (i32, i32, i32) {
    %c0_i32 = arith.constant 0 : i32
    %c0_i32_0 = arith.constant 0 : i32
    %c0_i32_1 = arith.constant 0 : i32
    return %arg0, %c0_i32, %c0_i32_0 : i32, i32, i32
  }
  func.func @transform_4(%arg0: i32, %arg1: i32) -> (i32, i32, i32) {
    %c0_i32 = arith.constant 0 : i32
    %c0_i32_0 = arith.constant 0 : i32
    %c0_i32_1 = arith.constant 0 : i32
    return %arg0, %c0_i32, %c0_i32_0 : i32, i32, i32
  }
  func.func @transform_5(%arg0: i32, %arg1: i32) -> (i32, i32, i32) {
    %c0_i32 = arith.constant 0 : i32
    %c0_i32_0 = arith.constant 0 : i32
    return %arg0, %c0_i32, %arg1 : i32, i32, i32
  }
  func.func @transform_6(%arg0: i32, %arg1: i32) -> (i32, i32, i32) {
    %c0_i32 = arith.constant 0 : i32
    %c0_i32_0 = arith.constant 0 : i32
    return %arg0, %c0_i32, %arg1 : i32, i32, i32
  }
  func.func @transform_7(%arg0: i32, %arg1: i32) -> (i32, i32, i32) {
    %c0_i32 = arith.constant 0 : i32
    %c0_i32_0 = arith.constant 0 : i32
    return %arg0, %c0_i32, %arg1 : i32, i32, i32
  }
}

</mosaic_0001>

<llo_original>
// kernel: additive_mix.2
$region0: #{additive_mix.2}
  #allocation0 [shape = 'u32[]', space=smem, size = 0x4, offset = 0x4, fixed_abs, tag = 'smem constant byte address 0x4 - core index']
  #allocation1 [shape = 'u32[144,128]{1,0:T(1,128)}', space=vmem, size = 0x12000, scoped, tag = 'internal scratch']
  %s0 = inlined_call_operand.hbm [shape: f32[2,4,16], index: 0, kind: input, shape index: {}]
  %s1 = inlined_call_operand.hbm [shape: f32[24,4], index: 1, kind: input, shape index: {}]
  %s2 = inlined_call_operand.hbm [shape: f32[2,1,8,1], index: 2, kind: output, shape index: {0}]
  %s3 = inlined_call_operand.hbm [shape: f32[2,1,8,1], index: 3, kind: output, shape index: {1}]
  %s4 = inlined_call_operand.hbm [shape: f32[2,1,8,1], index: 4, kind: output, shape index: {2}]
  %s5 = inlined_call_operand.hbm [shape: f32[2,1,8,1], index: 5, kind: output, shape index: {3}]
  %s6 = inlined_call_operand.hbm [shape: f32[2,1,8,1], index: 6, kind: output, shape index: {4}]
  %7 = xla_tuple %s2, %s3, %s4, %s5, %s6
  %s8 = sld [smem:[#allocation0]]
  $region85: #{additive_mix.2} parent=0
    _
  %s10 = ssub.s32 1, %s8
  %s11 = scalar_select 0, %s10, %s8
  $region1: #{additive_mix.2} parent=0
    #allocation2 [shape = 'u8[4096]{0}', space=vmem, size = 0x1000, scoped, tag = 'input window, operand 0']
    #allocation3 [shape = 's32[2]{0}', space=sflag, size = 0x8, scoped, tag = 'scoped memory for additive_mix.2']
    #allocation4 [shape = 's32[2]{0}', space=sflag, size = 0x8, scoped, tag = 'scoped memory for additive_mix.2']
    #allocation5 [shape = 'u8[12288]{0}', space=vmem, size = 0x3000, scoped, tag = 'input window, operand 1, single buffered']
    #allocation6 [shape = 's32[1]{0}', space=sflag, size = 0x4, scoped, tag = 'scoped memory for additive_mix.2']
    #allocation7 [shape = 'u8[8192]{0}', space=vmem, size = 0x2000, scoped, tag = 'output window, operand 0']
    #allocation8 [shape = 'u8[8192]{0}', space=vmem, size = 0x2000, scoped, tag = 'output window, operand 1']
    #allocation9 [shape = 's32[2]{0}', space=sflag, size = 0x8, scoped, tag = 'scoped memory for additive_mix.2']
    #allocation10 [shape = 'u8[8192]{0}', space=vmem, size = 0x2000, scoped, tag = 'output window, operand 2']
    #allocation11 [shape = 'u8[8192]{0}', space=vmem, size = 0x2000, scoped, tag = 'output window, operand 3']
    #allocation12 [shape = 's32[2]{0}', space=sflag, size = 0x8, scoped, tag = 'scoped memory for additive_mix.2']
    #allocation13 [shape = 'u8[8192]{0}', space=vmem, size = 0x2000, scoped, tag = 'output window, operand 4']
    %12 = vsyncpa [#allocation3], 0
    %s13 = scalar_lea.sflag [#allocation3], 1
    %14 = vsyncpa %s13, 0
    %15 = vsyncpa [#allocation6], 0
    %16 = vsyncpa [#allocation4], 0
    %s17 = scalar_lea.sflag [#allocation4], 1
    %18 = vsyncpa %s17, 0
    %19 = vsyncpa [#allocation9], 0
    %s20 = scalar_lea.sflag [#allocation9], 1
    %21 = vsyncpa %s20, 0
    %22 = vsyncpa [#allocation12], 0
    %s23 = scalar_lea.sflag [#allocation12], 1
    %24 = vsyncpa %s23, 0
    loop: start=0, step=1, limit=4
    $region2: #{additive_mix.2} parent=1 // loop_pre_header
      _
    $region3: #{additive_mix.2} parent=1 // loop_header
      %s26 = sphi 0, %s30
      %p27 = scmp.ge.s32.totalorder %s26, 4
      %s33 = sphi 0, %s52
      %s34 = sphi 0, %s48
      %s35 = sphi 0, %s44
      %s36 = sphi 0, %s33
      %s37 = sphi 0, %s34
      %s38 = sphi 0, %s35
      %s39 = sphi 0, %s36
      %s40 = sphi 0, %s37
      %s41 = sphi 0, %s38
      %s59 = sphi 0, %s61
      %s62 = sphi 0, %s59
      %s63 = sphi 0, %s62
      %s79 = sphi 0, %s63
      %s83 = sphi 0, %s83
      %s85 = sphi 0, %s83
      %s86 = sphi 0, %s85
      %s100 = sphi 0, %s86
      %s108 = sphi 0, %s110
      %s111 = sphi 0, %s108
      %s112 = sphi 0, %s111
      %s128 = sphi 0, %s112
      %s136 = sphi 0, %s138
      %s139 = sphi 0, %s136
      %s140 = sphi 0, %s139
      %s156 = sphi 0, %s140
      %s164 = sphi 0, %s166
      %s167 = sphi 0, %s164
      %s168 = sphi 0, %s167
      %s184 = sphi 0, %s168
      %s192 = sphi 0, %s194
      %s195 = sphi 0, %s192
      %s196 = sphi 0, %s195
      %s212 = sphi 0, %s196
      %s220 = sphi 0, %s222
      %s223 = sphi 0, %s220
      %s224 = sphi 0, %s223
      %s240 = sphi 0, %s224
    $region4: #{additive_mix.2} parent=1 // loop_header_branch
      %29 = sbr.rel (%p27) target = $region8
    $region5: #{additive_mix.2} parent=1 // loop_body
      %s31 = ssub.s32 %s26, 1
      %s32 = ssub.s32 %s26, 2
      %s42 = sadd.s32 1, %s35
      %p43 = scmp.ge.s32.totalorder %s42, 1
      %s44 = scalar_select %p43, 0, %s42
      %s45 = sadd.s32 1, %s34
      %s46 = scalar_select %p43, %s45, %s34
      %p47 = scmp.ge.s32.totalorder %s46, 1
      %s48 = scalar_select %p47, 0, %s46
      %s49 = sadd.s32 1, %s33
      %s50 = scalar_select %p47, %s49, %s33
      %p51 = scmp.ge.s32.totalorder %s50, 2
      %s52 = scalar_select %p51, 0, %s50
      %s53 = sadd.s32 %s34, %s35
      %s54 = sadd.s32 %s48, %s44
      %s55 = ssub.s32 %s33, %s52
      %s56 = ssub.s32 %s53, %s54
      %s57 = sor.u32 %s55, %s56
      %p58 = scmp.eq.s32.totalorder %s57, 0
      %s60 = sadd.s32 %s59, 1
      %s61 = scalar_select %p58, %s59, %s60
      %p64 = pneg %p58
      %p65 = scmp.eq.s32.totalorder %s26, 1
      %p66 = por %p64, %p65
      %p67 = scmp.ne.s32.totalorder %s59, %s62
      %p68 = scmp.eq.s32.totalorder %s26, 0
      %p69 = por %p67, %p68
      %p70 = scmp.ne.s32.totalorder %s59, %s62
      %p71 = scmp.eq.s32.totalorder %s31, 1
      %p72 = por %p70, %p71
      %p73 = scmp.ne.s32.totalorder %s62, %s63
      %p74 = scmp.eq.s32.totalorder %s31, 0
      %p75 = por %p73, %p74
      %p76 = scmp.ne.s32.totalorder %s62, %s63
      %p77 = scmp.eq.s32.totalorder %s32, 1
      %p78 = por %p76, %p77
      %p80 = scmp.ne.s32.totalorder %s63, %s79
      %p81 = scmp.eq.s32.totalorder %s32, 0
      %p82 = por %p80, %p81
      %s84 = sadd.s32 %s83, 1
      %p87 = scmp.eq.s32.totalorder %s26, 1
      %p88 = scmp.ne.s32.totalorder %s83, %s85
      %p89 = scmp.eq.s32.totalorder %s26, 0
      %p90 = por %p88, %p89
      %p91 = scmp.ne.s32.totalorder %s83, %s85
      %p92 = scmp.eq.s32.totalorder %s31, 1
      %p93 = por %p91, %p92
      %p94 = scmp.ne.s32.totalorder %s85, %s86
      %p95 = scmp.eq.s32.totalorder %s31, 0
      %p96 = por %p94, %p95
      %p97 = scmp.ne.s32.totalorder %s85, %s86
      %p98 = scmp.eq.s32.totalorder %s32, 1
      %p99 = por %p97, %p98
      %p101 = scmp.ne.s32.totalorder %s86, %s100
      %p102 = scmp.eq.s32.totalorder %s32, 0
      %p103 = por %p101, %p102
      %s104 = ssub.s32 %s33, %s52
      %s105 = ssub.s32 %s34, %s48
      %s106 = sor.u32 %s104, %s105
      %p107 = scmp.eq.s32.totalorder %s106, 0
      %s109 = sadd.s32 %s108, 1
      %s110 = scalar_select %p107, %s108, %s109
      %p113 = pneg %p107
      %p114 = scmp.eq.s32.totalorder %s26, 1
      %p115 = por %p113, %p114
      %p116 = scmp.ne.s32.totalorder %s108, %s111
      %p117 = scmp.eq.s32.totalorder %s26, 0
      %p118 = por %p116, %p117
      %p119 = scmp.ne.s32.totalorder %s108, %s111
      %p120 = scmp.eq.s32.totalorder %s31, 1
      %p121 = por %p119, %p120
      %p122 = scmp.ne.s32.totalorder %s111, %s112
      %p123 = scmp.eq.s32.totalorder %s31, 0
      %p124 = por %p122, %p123
      %p125 = scmp.ne.s32.totalorder %s111, %s112
      %p126 = scmp.eq.s32.totalorder %s32, 1
      %p127 = por %p125, %p126
      %p129 = scmp.ne.s32.totalorder %s112, %s128
      %p130 = scmp.eq.s32.totalorder %s32, 0
      %p131 = por %p129, %p130
      %s132 = ssub.s32 %s33, %s52
      %s133 = ssub.s32 %s34, %s48
      %s134 = sor.u32 %s132, %s133
      %p135 = scmp.eq.s32.totalorder %s134, 0
      %s137 = sadd.s32 %s136, 1
      %s138 = scalar_select %p135, %s136, %s137
      %p141 = pneg %p135
      %p142 = scmp.eq.s32.totalorder %s26, 1
      %p143 = por %p141, %p142
      %p144 = scmp.ne.s32.totalorder %s136, %s139
      %p145 = scmp.eq.s32.totalorder %s26, 0
      %p146 = por %p144, %p145
      %p147 = scmp.ne.s32.totalorder %s136, %s139
      %p148 = scmp.eq.s32.totalorder %s31, 1
      %p149 = por %p147, %p148
      %p150 = scmp.ne.s32.totalorder %s139, %s140
      %p151 = scmp.eq.s32.totalorder %s31, 0
      %p152 = por %p150, %p151
      %p153 = scmp.ne.s32.totalorder %s139, %s140
      %p154 = scmp.eq.s32.totalorder %s32, 1
      %p155 = por %p153, %p154
      %p157 = scmp.ne.s32.totalorder %s140, %s156
      %p158 = scmp.eq.s32.totalorder %s32, 0
      %p159 = por %p157, %p158
      %s160 = ssub.s32 %s33, %s52
      %s161 = ssub.s32 %s34, %s48
      %s162 = sor.u32 %s160, %s161
      %p163 = scmp.eq.s32.totalorder %s162, 0
      %s165 = sadd.s32 %s164, 1
      %s166 = scalar_select %p163, %s164, %s165
      %p169 = pneg %p163
      %p170 = scmp.eq.s32.totalorder %s26, 1
      %p171 = por %p169, %p170
      %p172 = scmp.ne.s32.totalorder %s164, %s167
      %p173 = scmp.eq.s32.totalorder %s26, 0
      %p174 = por %p172, %p173
      %p175 = scmp.ne.s32.totalorder %s164, %s167
      %p176 = scmp.eq.s32.totalorder %s31, 1
      %p177 = por %p175, %p176
      %p178 = scmp.ne.s32.totalorder %s167, %s168
      %p179 = scmp.eq.s32.totalorder %s31, 0
      %p180 = por %p178, %p179
      %p181 = scmp.ne.s32.totalorder %s167, %s168
      %p182 = scmp.eq.s32.totalorder %s32, 1
      %p183 = por %p181, %p182
      %p185 = scmp.ne.s32.totalorder %s168, %s184
      %p186 = scmp.eq.s32.totalorder %s32, 0
      %p187 = por %p185, %p186
      %s188 = ssub.s32 %s33, %s52
      %s189 = ssub.s32 %s34, %s48
      %s190 = sor.u32 %s188, %s189
      %p191 = scmp.eq.s32.totalorder %s190, 0
      %s193 = sadd.s32 %s192, 1
      %s194 = scalar_select %p191, %s192, %s193
      %p197 = pneg %p191
      %p198 = scmp.eq.s32.totalorder %s26, 1
      %p199 = por %p197, %p198
      %p200 = scmp.ne.s32.totalorder %s192, %s195
      %p201 = scmp.eq.s32.totalorder %s26, 0
      %p202 = por %p200, %p201
      %p203 = scmp.ne.s32.totalorder %s192, %s195
      %p204 = scmp.eq.s32.totalorder %s31, 1
      %p205 = por %p203, %p204
      %p206 = scmp.ne.s32.totalorder %s195, %s196
      %p207 = scmp.eq.s32.totalorder %s31, 0
      %p208 = por %p206, %p207
      %p209 = scmp.ne.s32.totalorder %s195, %s196
      %p210 = scmp.eq.s32.totalorder %s32, 1
      %p211 = por %p209, %p210
      %p213 = scmp.ne.s32.totalorder %s196, %s212
      %p214 = scmp.eq.s32.totalorder %s32, 0
      %p215 = por %p213, %p214
      %s216 = ssub.s32 %s33, %s52
      %s217 = ssub.s32 %s34, %s48
      %s218 = sor.u32 %s216, %s217
      %p219 = scmp.eq.s32.totalorder %s218, 0
      %s221 = sadd.s32 %s220, 1
      %s222 = scalar_select %p219, %s220, %s221
      %p225 = pneg %p219
      %p226 = scmp.eq.s32.totalorder %s26, 1
      %p227 = por %p225, %p226
      %p228 = scmp.ne.s32.totalorder %s220, %s223
      %p229 = scmp.eq.s32.totalorder %s26, 0
      %p230 = por %p228, %p229
      %p231 = scmp.ne.s32.totalorder %s220, %s223
      %p232 = scmp.eq.s32.totalorder %s31, 1
      %p233 = por %p231, %p232
      %p234 = scmp.ne.s32.totalorder %s223, %s224
      %p235 = scmp.eq.s32.totalorder %s31, 0
      %p236 = por %p234, %p235
      %p237 = scmp.ne.s32.totalorder %s223, %s224
      %p238 = scmp.eq.s32.totalorder %s32, 1
      %p239 = por %p237, %p238
      %p241 = scmp.ne.s32.totalorder %s224, %s240
      %p242 = scmp.eq.s32.totalorder %s32, 0
      %p243 = por %p241, %p242
      %p244 = scmp.le.s32.totalorder 1, %s26
      %p245 = scmp.lt.s32.totalorder %s26, 3
      %p246 = pnand %p244, %p245
      %p247 = pneg %p246
      // Predicated region
      $region9: #{additive_mix.2} parent=5 // pred_check
        _
      $region10: #{additive_mix.2} parent=5 // pred_check_branch
        %249 = sbr.rel (%p246) target = $region12
      $region11: #{additive_mix.2} parent=5 // pred_region
        %s250 = ssub.s32 %s26, 1
        // Predicated region
        $region13: #{additive_mix.2} parent=11 // pred_check
          %p251 = pneg %p96
        $region14: #{additive_mix.2} parent=11 // pred_check_branch
          %253 = sbr.rel (%p251) target = $region16
        $region15: #{additive_mix.2} parent=11 // pred_region
          %s255 = ssub.s32 384, 384
          %256 = vsyncadd [#allocation6], %s255
          %s257 = sshll.u32 [#allocation5], 4
          %s258 = int_to_ptr.vmem [resolvable:$true] %s257
          %263 = dma.hbm_to_vmem [thread:$0]  %s1, 384, %s258, [#allocation6], 128, 128, 8
        $region16: #{additive_mix.2} parent=11 // pred_fallthru
          _
      $region12: #{additive_mix.2} parent=5 // pred_fallthru
        _
      %p264 = scmp.lt.s32.totalorder %s26, 2
      // Predicated region
      $region17: #{additive_mix.2} parent=5 // pred_check
        %p265 = pneg %p264
      $region18: #{additive_mix.2} parent=5 // pred_check_branch
        %267 = sbr.rel (%p265) target = $region20
      $region19: #{additive_mix.2} parent=5 // pred_region
        // Predicated region
        $region21: #{additive_mix.2} parent=19 // pred_check
          %p268 = pneg %p69
        $region22: #{additive_mix.2} parent=19 // pred_check_branch
          %270 = sbr.rel (%p268) target = $region24
        $region23: #{additive_mix.2} parent=19 // pred_region
          %s271 = sand.u32 %s59, 1
          %s272 = scalar_lea.sflag [#allocation3], %s271
          %s273 = sand.u32 %s59, 1
          %s274 = smul.addr %s273, 4
          %s275 = scalar_lea.vmem [#allocation2], %s274
          %s276 = sadd.s32 %s34, %s35
          %s278 = ssub.s32 64, 64
          %279 = vsyncadd %s272, %s278
          %s280 = sadd.s32 %s276, %s33
          %s281 = smul.addr %s280, 64
          %s282 = scalar_lea.hbm %s0, %s281
          %s284 = sshll.u32 %s275, 4
          %s285 = int_to_ptr.vmem [resolvable:$true] %s284
          %287 = dma.hbm_to_vmem [thread:$0]  %s282, 64, %s285, %s272
        $region24: #{additive_mix.2} parent=19 // pred_fallthru
          _
      $region20: #{additive_mix.2} parent=5 // pred_fallthru
        _
      %p288 = scmp.le.s32.totalorder 1, %s26
      %p289 = scmp.lt.s32.totalorder %s26, 3
      %p290 = pnand %p288, %p289
      %p291 = pneg %p290
      // Predicated region
      $region25: #{additive_mix.2} parent=5 // pred_check
        _
      $region26: #{additive_mix.2} parent=5 // pred_check_branch
        %293 = sbr.rel (%p290) target = $region28
      $region27: #{additive_mix.2} parent=5 // pred_region
        %s294 = ssub.s32 %s26, 1
        %s295 = sand.u32 %s62, 1
        %s296 = scalar_lea.sflag [#allocation3], %s295
        %s297 = sand.u32 %s62, 1
        %s298 = smul.addr %s297, 4
        %s299 = scalar_lea.vmem [#allocation2], %s298
        // Predicated region
        $region29: #{additive_mix.2} parent=27 // pred_check
          %p300 = pneg %p75
        $region30: #{additive_mix.2} parent=27 // pred_check_branch
          %302 = sbr.rel (%p300) target = $region32
        $region31: #{additive_mix.2} parent=27 // pred_region
          %303 = dma.done %s296, 64
        $region32: #{additive_mix.2} parent=27 // pred_fallthru
          _
        // Predicated region
        $region33: #{additive_mix.2} parent=27 // pred_check
          %p304 = pneg %p96
        $region34: #{additive_mix.2} parent=27 // pred_check_branch
          %306 = sbr.rel (%p304) target = $region36
        $region35: #{additive_mix.2} parent=27 // pred_region
          %307 = dma.done [#allocation6], 384
        $region36: #{additive_mix.2} parent=27 // pred_fallthru
          _
        %s308 = sand.u32 %s62, 1
        %s309 = scalar_lea.sflag [#allocation3], %s308
        %s310 = sand.u32 %s62, 1
        %s311 = smul.addr %s310, 4
        %s312 = scalar_lea.vmem [#allocation2], %s311
        %p313 = pneg %p75
        %p314 = pneg %p72
        %p315 = pneg %p96
        %p316 = pneg %p93
        %p317 = pneg %p124
        %p318 = pneg %p121
        %s319 = sand.u32 %s111, 1
        %s320 = scalar_lea.sflag [#allocation4], %s319
        %s321 = sand.u32 %s111, 1
        %s322 = smul.addr %s321, 8
        %s323 = scalar_lea.vmem [#allocation7], %s322
        %p324 = pneg %p152
        %p325 = pneg %p149
        %s326 = sand.u32 %s31, 1
        %s327 = scalar_lea.sflag [#allocation9], %s326
        %s328 = sand.u32 %s139, 1
        %s329 = smul.addr %s328, 8
        %s330 = scalar_lea.vmem [#allocation8], %s329
        %p331 = pneg %p180
        %p332 = pneg %p177
        %s333 = sand.u32 %s31, 1
        %s334 = scalar_lea.sflag [#allocation9], %s333
        %s335 = sand.u32 %s167, 1
        %s336 = smul.addr %s335, 8
        %s337 = scalar_lea.vmem [#allocation10], %s336
        %p338 = pneg %p208
        %p339 = pneg %p205
        %s340 = sand.u32 %s31, 1
        %s341 = scalar_lea.sflag [#allocation12], %s340
        %s342 = sand.u32 %s195, 1
        %s343 = smul.addr %s342, 8
        %s344 = scalar_lea.vmem [#allocation11], %s343
        %p345 = pneg %p236
        %p346 = pneg %p233
        %s347 = sand.u32 %s31, 1
        %s348 = scalar_lea.sflag [#allocation12], %s347
        %s349 = sand.u32 %s223, 1
        %s350 = smul.addr %s349, 8
        %s351 = scalar_lea.vmem [#allocation13], %s350
        %s352 = sadd.s32 %s37, %s38
        %p353 = scmp.eq.s32.totalorder %s38, 0
        // Predicated region
        $region37: #{additive_mix.2} parent=27 // pred_check
          %p354 = pneg %p353
        $region38: #{additive_mix.2} parent=27 // pred_check_branch
          %356 = sbr.rel (%p354) target = $region40
        $region39: #{additive_mix.2} parent=27 // pred_region
          %vm357 = vcmask 7168
          %358 = vst.msk [vmem:[%s323] sm:$0xff] %vm357, -inf
          %359 = vst.msk [vmem:[%s337] sm:$0xff] %vm357, -inf
          %360 = vst.msk [vmem:[%s330] sm:$0xff] %vm357, 0.0
          %361 = vst.msk [vmem:[%s344] sm:$0xff] %vm357, 0.0
          %362 = vst.msk [vmem:[%s351] sm:$0xff] %vm357, 0.0
        $region40: #{additive_mix.2} parent=27 // pred_fallthru
          _
        %v363 = vld [vmem:[%s299] sm:$0xf]
        %v364 = vld [vmem:[#allocation5] sm:$0xff]
        %v365 = vld [vmem:[#allocation5 + $0x8] sm:$0xff]
        %v366 = vld [vmem:[#allocation5 + $0x10] sm:$0xff]
        %vm367 = vcmask 31744
        %v369 = vsel %vm367, %v364, 0
        %v372 = vsel %vm367, %v365, 0
        %v375 = vsel %vm367, %v366, 0
        %vm377 = vcmask 1043456
        %v379 = vsel %vm377, %v363, 0
        %381 = vmatprep.subr.mxu0 0.0
        %382 = vmatpush1.msra.mxu0 %v379
        %383 = vmatprep.subr.mxu0 0.0
        %384 = vmatpush1.msra.mxu0 0.0
        %385 = vmatprep.subr.mxu0 0.0
        %386 = vmatpush1.msra.mxu0 0.0
        %387 = vmatprep.subr.mxu0 0.0
        %388 = vmatpush1.msra.mxu0 0.0
        %389 = vmatprep.subr.mxu0 0.0
        %390 = vmatpush1.msra.mxu0 0.0
        %391 = vmatprep.subr.mxu0 0.0
        %392 = vmatpush1.msra.mxu0 0.0
        %393 = vmatprep.subr.mxu0 0.0
        %394 = vmatpush1.msra.mxu0 0.0
        %395 = vmatprep.subr.mxu0 0.0
        %396 = vmatpush1.msra.mxu0 0.0
        %397 = vmatprep.subr.mxu0 0.0
        %398 = vmatpush1.msra.mxu0 0.0
        %399 = vmatprep.subr.mxu0 0.0
        %400 = vmatpush1.msra.mxu0 0.0
        %401 = vmatprep.subr.mxu0 0.0
        %402 = vmatpush1.msra.mxu0 0.0
        %403 = vmatprep.subr.mxu0 0.0
        %404 = vmatpush1.msra.mxu0 0.0
        %405 = vmatprep.subr.mxu0 0.0
        %406 = vmatpush1.msra.mxu0 0.0
        %407 = vmatprep.subr.mxu0 0.0
        %408 = vmatpush1.msra.mxu0 0.0
        %409 = vmatprep.subr.mxu0 0.0
        %410 = vmatpush1.msra.mxu0 0.0
        %411 = vmatprep.subr.mxu0 0.0
        %412 = vmatpush1.msra.mxu0 0.0
        %413 = vmatprep.subr.mxu0 0.0
        %414 = vmatpush1.msra.mxu0 0.0
        %415 = vmatprep.subr.mxu0 0.0
        %416 = vmatpush1.msra.mxu0 0.0
        %417 = vmatprep.subr.mxu0 0.0
        %418 = vmatpush1.msra.mxu0 0.0
        %419 = vmatprep.subr.mxu0 0.0
        %420 = vmatpush1.msra.mxu0 0.0
        %421 = vmatprep.subr.mxu0 0.0
        %422 = vmatpush1.msra.mxu0 0.0
        %423 = vmatprep.subr.mxu0 0.0
        %424 = vmatpush1.msra.mxu0 0.0
        %425 = vmatprep.subr.mxu0 0.0
        %426 = vmatpush1.msra.mxu0 0.0
        %427 = vmatprep.subr.mxu0 0.0
        %428 = vmatpush1.msra.mxu0 0.0
        %429 = vmatprep.subr.mxu0 0.0
        %430 = vmatpush1.msra.mxu0 0.0
        %431 = vmatprep.subr.mxu0 0.0
        %432 = vmatpush1.msra.mxu0 0.0
        %433 = vmatprep.subr.mxu0 0.0
        %434 = vmatpush1.msra.mxu0 0.0
        %435 = vmatprep.subr.mxu0 0.0
        %436 = vmatpush1.msra.mxu0 0.0
        %437 = vmatprep.subr.mxu0 0.0
        %438 = vmatpush1.msra.mxu0 0.0
        %439 = vmatprep.subr.mxu0 0.0
        %440 = vmatpush1.msra.mxu0 0.0
        %441 = vmatprep.subr.mxu0 0.0
        %442 = vmatpush1.msra.mxu0 0.0
        %443 = vmatprep.subr.mxu0 0.0
        %444 = vmatpush1.msra.mxu0 0.0
        %445 = vmatprep.mubr.f32.mxu0 0.0
        %446 = vmatmul.mubr.f32.gmra.mrb[0].mxu0 %v369
        %v447 = vpop.f32.mrb[0].mxu0
        %v448 = vadd.f32 0.0, %v447
        %v449 = vpop.f32.mrb[0].mxu0
        %450 = vmatprep.mubr.f32.mxu0 0.0
        %451 = vmatmul.mubr.f32.gmra.mrb[0].mxu0 %v372
        %v452 = vpop.f32.mrb[0].mxu0
        %v453 = vadd.f32 0.0, %v452
        %v454 = vpop.f32.mrb[0].mxu0
        %455 = vmatprep.mubr.f32.mxu0 0.0
        %456 = vmatmul.mubr.f32.gmra.mrb[0].mxu0 %v375
        %v457 = vpop.f32.mrb[0].mxu0
        %v458 = vadd.f32 0.0, %v457
        %v459 = vpop.f32.mrb[0].mxu0
        %460 = vdwg.mxu0
        %v461 = vld [vmem:[%s323] sm:$0xff]
        %vm462 = vcmask 130048
        %v463 = vsel %vm462, %v448, -inf
        %464 = vmax.xlane.f32.xlu0 %v463
        %v465 = vpop.xlane.xlu0 %464
        %v466 = vmax.f32 %v461, %v465
        %v467 = vmax.f32 %v466, -1e+30
        %v468 = vld [vmem:[%s330] sm:$0xff]
        %v469 = vsub.f32 %v461, %v467
        %v470 = vmul.f32 %v469, 1.442695
        %v471 = vpow.pop %v470
        %v472 = vmul.f32 %v468, %v471
        %474 = vset.pattern.permute.xlu0 0
        %475 = vperm.xlu0 %474, %v467
        %v476 = vpop.permute.xlu0 %475
        %v478 = vsub.f32 %v448, %v476
        %v479 = vmul.f32 %v478, 1.442695
        %v480 = vpow.pop %v479
        %v481 = vsel %vm462, %v480, 0.0
        %482 = vadd.xlane.f32.xlu0 %v481
        %v483 = vpop.xlane.xlu0 %482
        %v484 = vadd.f32 %v472, %v483
        %vm485 = vcmask 7168
        %486 = vst.msk [vmem:[%s330] sm:$0xff] %vm485, %v484
        %487 = vst.msk [vmem:[%s323] sm:$0xff] %vm485, %v467
        %v488 = vld [vmem:[%s337] sm:$0xff]
        %v489 = vsel %vm462, %v453, -inf
        %490 = vmax.xlane.f32.xlu0 %v489
        %v491 = vpop.xlane.xlu0 %490
        %v492 = vmax.f32 %v488, %v491
        %v493 = vmax.f32 %v492, -1e+30
        %v494 = vld [vmem:[%s344] sm:$0xff]
        %v495 = vsub.f32 %v488, %v493
        %v496 = vmul.f32 %v495, 1.442695
        %v497 = vpow.pop %v496
        %v498 = vmul.f32 %v494, %v497
        %500 = vset.pattern.permute.xlu0 0
        %501 = vperm.xlu0 %500, %v493
        %v502 = vpop.permute.xlu0 %501
        %v504 = vsub.f32 %v453, %v502
        %v505 = vmul.f32 %v504, 1.442695
        %v506 = vpow.pop %v505
        %v507 = vsel %vm462, %v506, 0.0
        %508 = vadd.xlane.f32.xlu0 %v507
        %v509 = vpop.xlane.xlu0 %508
        %v510 = vadd.f32 %v498, %v509
        %511 = vst.msk [vmem:[%s344] sm:$0xff] %vm485, %v510
        %512 = vst.msk [vmem:[%s337] sm:$0xff] %vm485, %v493
        %v513 = vld [vmem:[%s351] sm:$0xff]
        %v514 = vsel %vm462, %v458, 0.0
        %515 = vadd.xlane.f32.xlu0 %v514
        %v516 = vpop.xlane.xlu0 %515
        %v517 = vadd.f32 %v513, %v516
        %518 = vst.msk [vmem:[%s351] sm:$0xff] %vm485, %v517
        %s519 = sand.u32 %s111, 1
        %s520 = scalar_lea.sflag [#allocation4], %s519
        %s521 = sand.u32 %s111, 1
        %s522 = smul.addr %s521, 8
        %s523 = scalar_lea.vmem [#allocation7], %s522
        %s524 = sand.u32 %s31, 1
        %s525 = scalar_lea.sflag [#allocation9], %s524
        %s526 = sand.u32 %s139, 1
        %s527 = smul.addr %s526, 8
        %s528 = scalar_lea.vmem [#allocation8], %s527
        %s529 = sand.u32 %s31, 1
        %s530 = scalar_lea.sflag [#allocation9], %s529
        %s531 = sand.u32 %s167, 1
        %s532 = smul.addr %s531, 8
        %s533 = scalar_lea.vmem [#allocation10], %s532
        %s534 = sand.u32 %s31, 1
        %s535 = scalar_lea.sflag [#allocation12], %s534
        %s536 = sand.u32 %s195, 1
        %s537 = smul.addr %s536, 8
        %s538 = scalar_lea.vmem [#allocation11], %s537
        %s539 = sand.u32 %s31, 1
        %s540 = scalar_lea.sflag [#allocation12], %s539
        %s541 = sand.u32 %s223, 1
        %s542 = smul.addr %s541, 8
        %s543 = scalar_lea.vmem [#allocation13], %s542
        // Predicated region
        $region41: #{additive_mix.2} parent=27 // pred_check
          %p544 = pneg %p121
        $region42: #{additive_mix.2} parent=27 // pred_check_branch
          %546 = sbr.rel (%p544) target = $region44
        $region43: #{additive_mix.2} parent=27 // pred_region
          %s548 = ssub.s32 128, 128
          %549 = vsyncadd %s520, %s548
          %s550 = sadd.s32 %s37, %s36
          %s551 = smul.addr %s550, 128
          %s552 = scalar_lea.hbm %s2, %s551
          %s554 = sshll.u32 %s523, 4
          %s555 = int_to_ptr.vmem [resolvable:$true] %s554
          %557 = dma.vmem_to_hbm [thread:$0]  %s555, 128, %s552, %s520
        $region44: #{additive_mix.2} parent=27 // pred_fallthru
          _
        // Predicated region
        $region45: #{additive_mix.2} parent=27 // pred_check
          %p558 = pneg %p149
        $region46: #{additive_mix.2} parent=27 // pred_check_branch
          %560 = sbr.rel (%p558) target = $region48
        $region47: #{additive_mix.2} parent=27 // pred_region
          %s562 = ssub.s32 128, 128
          %563 = vsyncadd %s525, %s562
          %s564 = sadd.s32 %s37, %s36
          %s565 = smul.addr %s564, 128
          %s566 = scalar_lea.hbm %s3, %s565
          %s568 = sshll.u32 %s528, 4
          %s569 = int_to_ptr.vmem [resolvable:$true] %s568
          %571 = dma.vmem_to_hbm [thread:$0]  %s569, 128, %s566, %s525
        $region48: #{additive_mix.2} parent=27 // pred_fallthru
          _
        // Predicated region
        $region49: #{additive_mix.2} parent=27 // pred_check
          %p572 = pneg %p177
        $region50: #{additive_mix.2} parent=27 // pred_check_branch
          %574 = sbr.rel (%p572) target = $region52
        $region51: #{additive_mix.2} parent=27 // pred_region
          %s576 = ssub.s32 128, 128
          %577 = vsyncadd %s530, %s576
          %s578 = sadd.s32 %s37, %s36
          %s579 = smul.addr %s578, 128
          %s580 = scalar_lea.hbm %s4, %s579
          %s582 = sshll.u32 %s533, 4
          %s583 = int_to_ptr.vmem [resolvable:$true] %s582
          %585 = dma.vmem_to_hbm [thread:$0]  %s583, 128, %s580, %s530
        $region52: #{additive_mix.2} parent=27 // pred_fallthru
          _
        // Predicated region
        $region53: #{additive_mix.2} parent=27 // pred_check
          %p586 = pneg %p205
        $region54: #{additive_mix.2} parent=27 // pred_check_branch
          %588 = sbr.rel (%p586) target = $region56
        $region55: #{additive_mix.2} parent=27 // pred_region
          %s590 = ssub.s32 128, 128
          %591 = vsyncadd %s535, %s590
          %s592 = sadd.s32 %s37, %s36
          %s593 = smul.addr %s592, 128
          %s594 = scalar_lea.hbm %s5, %s593
          %s596 = sshll.u32 %s538, 4
          %s597 = int_to_ptr.vmem [resolvable:$true] %s596
          %599 = dma.vmem_to_hbm [thread:$0]  %s597, 128, %s594, %s535
        $region56: #{additive_mix.2} parent=27 // pred_fallthru
          _
        // Predicated region
        $region57: #{additive_mix.2} parent=27 // pred_check
          %p600 = pneg %p233
        $region58: #{additive_mix.2} parent=27 // pred_check_branch
          %602 = sbr.rel (%p600) target = $region60
        $region59: #{additive_mix.2} parent=27 // pred_region
          %s604 = ssub.s32 128, 128
          %605 = vsyncadd %s540, %s604
          %s606 = sadd.s32 %s37, %s36
          %s607 = smul.addr %s606, 128
          %s608 = scalar_lea.hbm %s6, %s607
          %s610 = sshll.u32 %s543, 4
          %s611 = int_to_ptr.vmem [resolvable:$true] %s610
          %613 = dma.vmem_to_hbm [thread:$0]  %s611, 128, %s608, %s540
        $region60: #{additive_mix.2} parent=27 // pred_fallthru
          _
      $region28: #{additive_mix.2} parent=5 // pred_fallthru
        _
      %p614 = scmp.le.s32.totalorder 2, %s26
      // Predicated region
      $region61: #{additive_mix.2} parent=5 // pred_check
        %p615 = pneg %p614
      $region62: #{additive_mix.2} parent=5 // pred_check_branch
        %617 = sbr.rel (%p615) target = $region64
      $region63: #{additive_mix.2} parent=5 // pred_region
        %s618 = ssub.s32 %s26, 2
        // Predicated region
        $region65: #{additive_mix.2} parent=63 // pred_check
          %p619 = pneg %p127
        $region66: #{additive_mix.2} parent=63 // pred_check_branch
          %621 = sbr.rel (%p619) target = $region68
        $region67: #{additive_mix.2} parent=63 // pred_region
          %s622 = sand.u32 %s112, 1
          %s623 = scalar_lea.sflag [#allocation4], %s622
          %s624 = sand.u32 %s112, 1
          %s625 = smul.addr %s624, 8
          %s626 = scalar_lea.vmem [#allocation7], %s625
          %627 = dma.done %s623, 128
        $region68: #{additive_mix.2} parent=63 // pred_fallthru
          _
        // Predicated region
        $region69: #{additive_mix.2} parent=63 // pred_check
          %p628 = pneg %p155
        $region70: #{additive_mix.2} parent=63 // pred_check_branch
          %630 = sbr.rel (%p628) target = $region72
        $region71: #{additive_mix.2} parent=63 // pred_region
          %s631 = sand.u32 %s32, 1
          %s632 = scalar_lea.sflag [#allocation9], %s631
          %s633 = sand.u32 %s140, 1
          %s634 = smul.addr %s633, 8
          %s635 = scalar_lea.vmem [#allocation8], %s634
          %636 = dma.done %s632, 128
        $region72: #{additive_mix.2} parent=63 // pred_fallthru
          _
        // Predicated region
        $region73: #{additive_mix.2} parent=63 // pred_check
          %p637 = pneg %p183
        $region74: #{additive_mix.2} parent=63 // pred_check_branch
          %639 = sbr.rel (%p637) target = $region76
        $region75: #{additive_mix.2} parent=63 // pred_region
          %s640 = sand.u32 %s32, 1
          %s641 = scalar_lea.sflag [#allocation9], %s640
          %s642 = sand.u32 %s168, 1
          %s643 = smul.addr %s642, 8
          %s644 = scalar_lea.vmem [#allocation10], %s643
          %645 = dma.done %s641, 128
        $region76: #{additive_mix.2} parent=63 // pred_fallthru
          _
        // Predicated region
        $region77: #{additive_mix.2} parent=63 // pred_check
          %p646 = pneg %p211
        $region78: #{additive_mix.2} parent=63 // pred_check_branch
          %648 = sbr.rel (%p646) target = $region80
        $region79: #{additive_mix.2} parent=63 // pred_region
          %s649 = sand.u32 %s32, 1
          %s650 = scalar_lea.sflag [#allocation12], %s649
          %s651 = sand.u32 %s196, 1
          %s652 = smul.addr %s651, 8
          %s653 = scalar_lea.vmem [#allocation11], %s652
          %654 = dma.done %s650, 128
        $region80: #{additive_mix.2} parent=63 // pred_fallthru
          _
        // Predicated region
        $region81: #{additive_mix.2} parent=63 // pred_check
          %p655 = pneg %p239
        $region82: #{additive_mix.2} parent=63 // pred_check_branch
          %657 = sbr.rel (%p655) target = $region84
        $region83: #{additive_mix.2} parent=63 // pred_region
          %s658 = sand.u32 %s32, 1
          %s659 = scalar_lea.sflag [#allocation12], %s658
          %s660 = sand.u32 %s224, 1
          %s661 = smul.addr %s660, 8
          %s662 = scalar_lea.vmem [#allocation13], %s661
          %663 = dma.done %s659, 128
        $region84: #{additive_mix.2} parent=63 // pred_fallthru
          _
      $region64: #{additive_mix.2} parent=5 // pred_fallthru
        _
    $region6: #{additive_mix.2} parent=1 // loop_footer
      %s30 = sadd.s32 1, %s26
    $region7: #{additive_mix.2} parent=1 // loop_footer_branch
      %25 = sbr.rel target = $region3
    $region8: #{additive_mix.2} parent=1 // loop_exit
      _
    %664 = vsyncpa [#allocation3], 1
    %s665 = scalar_lea.sflag [#allocation3], 1
    %666 = vsyncpa %s665, 1
    %667 = vsyncpa [#allocation6], 1
    %668 = vsyncpa [#allocation4], 1
    %s669 = scalar_lea.sflag [#allocation4], 1
    %670 = vsyncpa %s669, 1
    %671 = vsyncpa [#allocation9], 1
    %s672 = scalar_lea.sflag [#allocation9], 1
    %673 = vsyncpa %s672, 1
    %674 = vsyncpa [#allocation12], 1
    %s675 = scalar_lea.sflag [#allocation12], 1
    %676 = vsyncpa %s675, 1

// kernel: additive_mix.3
$region0: #{additive_mix.3}
  #allocation0 [shape = 'u32[]', space=smem, size = 0x4, offset = 0x4, fixed_abs, tag = 'smem constant byte address 0x4 - core index']
  #allocation1 [shape = 'u32[144,128]{1,0:T(1,128)}', space=vmem, size = 0x12000, scoped, tag = 'internal scratch']
  %s0 = inlined_call_operand.hbm [shape: f32[2,4,16], index: 0, kind: input, shape index: {}]
  %s1 = inlined_call_operand.hbm [shape: f32[16,4], index: 1, kind: input, shape index: {}]
  %s2 = inlined_call_operand.hbm [shape: f32[2,8,1], index: 2, kind: input, shape index: {}]
  %s3 = inlined_call_operand.hbm [shape: f32[2,8,1], index: 3, kind: input, shape index: {}]
  %s4 = inlined_call_operand.hbm [shape: f32[2,8,1], index: 4, kind: input, shape index: {}]
  %s5 = inlined_call_operand.hbm [shape: f32[2,4,16], index: 5, kind: output, shape index: {0}]
  %s6 = inlined_call_operand.hbm [shape: f32[2,4,16], index: 6, kind: output, shape index: {1}]
  %s7 = inlined_call_operand.hbm [shape: f32[2,4,16], index: 7, kind: output, shape index: {2}]
  %8 = xla_tuple %s5, %s6, %s7
  %s9 = sld [smem:[#allocation0]]
  $region89: #{additive_mix.3} parent=0
    _
  %s11 = ssub.s32 1, %s9
  %s12 = scalar_select 0, %s11, %s9
  $region1: #{additive_mix.3} parent=0
    #allocation2 [shape = 'u8[4096]{0}', space=vmem, size = 0x1000, scoped, tag = 'input window, operand 0']
    #allocation3 [shape = 's32[2]{0}', space=sflag, size = 0x8, scoped, tag = 'scoped memory for additive_mix.3']
    #allocation4 [shape = 's32[2]{0}', space=sflag, size = 0x8, scoped, tag = 'scoped memory for additive_mix.3']
    #allocation5 [shape = 'u8[8192]{0}', space=vmem, size = 0x2000, scoped, tag = 'input window, operand 1, single buffered']
    #allocation6 [shape = 's32[1]{0}', space=sflag, size = 0x4, scoped, tag = 'scoped memory for additive_mix.3']
    #allocation7 [shape = 'u8[8192]{0}', space=vmem, size = 0x2000, scoped, tag = 'input window, operand 2']
    #allocation8 [shape = 'u8[8192]{0}', space=vmem, size = 0x2000, scoped, tag = 'input window, operand 3']
    #allocation9 [shape = 'u8[8192]{0}', space=vmem, size = 0x2000, scoped, tag = 'input window, operand 4']
    #allocation10 [shape = 'u8[8192]{0}', space=vmem, size = 0x2000, scoped, tag = 'output window, operand 0']
    #allocation11 [shape = 'u8[8192]{0}', space=vmem, size = 0x2000, scoped, tag = 'output window, operand 1']
    #allocation12 [shape = 's32[2]{0}', space=sflag, size = 0x8, scoped, tag = 'scoped memory for additive_mix.3']
    #allocation13 [shape = 'u8[8192]{0}', space=vmem, size = 0x2000, scoped, tag = 'output window, operand 2']
    %13 = vsyncpa [#allocation3], 0
    %s14 = scalar_lea.sflag [#allocation3], 1
    %15 = vsyncpa %s14, 0
    %16 = vsyncpa [#allocation6], 0
    %17 = vsyncpa [#allocation4], 0
    %s18 = scalar_lea.sflag [#allocation4], 1
    %19 = vsyncpa %s18, 0
    %20 = vsyncpa [#allocation12], 0
    %s21 = scalar_lea.sflag [#allocation12], 1
    %22 = vsyncpa %s21, 0
    loop: start=0, step=1, limit=4
    $region2: #{additive_mix.3} parent=1 // loop_pre_header
      _
    $region3: #{additive_mix.3} parent=1 // loop_header
      %s24 = sphi 0, %s28
      %p25 = scmp.ge.s32.totalorder %s24, 4
      %s31 = sphi 0, %s43
      %s32 = sphi 0, %s39
      %s33 = sphi 0, %s31
      %s34 = sphi 0, %s32
      %s35 = sphi 0, %s33
      %s36 = sphi 0, %s34
      %s48 = sphi 0, %s50
      %s51 = sphi 0, %s48
      %s52 = sphi 0, %s51
      %s68 = sphi 0, %s52
      %s72 = sphi 0, %s72
      %s74 = sphi 0, %s72
      %s75 = sphi 0, %s74
      %s89 = sphi 0, %s75
      %s95 = sphi 0, %s97
      %s98 = sphi 0, %s95
      %s99 = sphi 0, %s98
      %s115 = sphi 0, %s99
      %s121 = sphi 0, %s123
      %s124 = sphi 0, %s121
      %s125 = sphi 0, %s124
      %s141 = sphi 0, %s125
      %s147 = sphi 0, %s149
      %s150 = sphi 0, %s147
      %s151 = sphi 0, %s150
      %s167 = sphi 0, %s151
      %s175 = sphi 0, %s177
      %s178 = sphi 0, %s175
      %s179 = sphi 0, %s178
      %s195 = sphi 0, %s179
      %s203 = sphi 0, %s205
      %s206 = sphi 0, %s203
      %s207 = sphi 0, %s206
      %s223 = sphi 0, %s207
      %s231 = sphi 0, %s233
      %s234 = sphi 0, %s231
      %s235 = sphi 0, %s234
      %s251 = sphi 0, %s235
    $region4: #{additive_mix.3} parent=1 // loop_header_branch
      %27 = sbr.rel (%p25) target = $region8
    $region5: #{additive_mix.3} parent=1 // loop_body
      %s29 = ssub.s32 %s24, 1
      %s30 = ssub.s32 %s24, 2
      %s37 = sadd.s32 1, %s32
      %p38 = scmp.ge.s32.totalorder %s37, 1
      %s39 = scalar_select %p38, 0, %s37
      %s40 = sadd.s32 1, %s31
      %s41 = scalar_select %p38, %s40, %s31
      %p42 = scmp.ge.s32.totalorder %s41, 2
      %s43 = scalar_select %p42, 0, %s41
      %s44 = ssub.s32 %s31, %s43
      %s45 = ssub.s32 %s32, %s39
      %s46 = sor.u32 %s44, %s45
      %p47 = scmp.eq.s32.totalorder %s46, 0
      %s49 = sadd.s32 %s48, 1
      %s50 = scalar_select %p47, %s48, %s49
      %p53 = pneg %p47
      %p54 = scmp.eq.s32.totalorder %s24, 1
      %p55 = por %p53, %p54
      %p56 = scmp.ne.s32.totalorder %s48, %s51
      %p57 = scmp.eq.s32.totalorder %s24, 0
      %p58 = por %p56, %p57
      %p59 = scmp.ne.s32.totalorder %s48, %s51
      %p60 = scmp.eq.s32.totalorder %s29, 1
      %p61 = por %p59, %p60
      %p62 = scmp.ne.s32.totalorder %s51, %s52
      %p63 = scmp.eq.s32.totalorder %s29, 0
      %p64 = por %p62, %p63
      %p65 = scmp.ne.s32.totalorder %s51, %s52
      %p66 = scmp.eq.s32.totalorder %s30, 1
      %p67 = por %p65, %p66
      %p69 = scmp.ne.s32.totalorder %s52, %s68
      %p70 = scmp.eq.s32.totalorder %s30, 0
      %p71 = por %p69, %p70
      %s73 = sadd.s32 %s72, 1
      %p76 = scmp.eq.s32.totalorder %s24, 1
      %p77 = scmp.ne.s32.totalorder %s72, %s74
      %p78 = scmp.eq.s32.totalorder %s24, 0
      %p79 = por %p77, %p78
      %p80 = scmp.ne.s32.totalorder %s72, %s74
      %p81 = scmp.eq.s32.totalorder %s29, 1
      %p82 = por %p80, %p81
      %p83 = scmp.ne.s32.totalorder %s74, %s75
      %p84 = scmp.eq.s32.totalorder %s29, 0
      %p85 = por %p83, %p84
      %p86 = scmp.ne.s32.totalorder %s74, %s75
      %p87 = scmp.eq.s32.totalorder %s30, 1
      %p88 = por %p86, %p87
      %p90 = scmp.ne.s32.totalorder %s75, %s89
      %p91 = scmp.eq.s32.totalorder %s30, 0
      %p92 = por %p90, %p91
      %s93 = ssub.s32 %s31, %s43
      %p94 = scmp.eq.s32.totalorder %s93, 0
      %s96 = sadd.s32 %s95, 1
      %s97 = scalar_select %p94, %s95, %s96
      %p100 = pneg %p94
      %p101 = scmp.eq.s32.totalorder %s24, 1
      %p102 = por %p100, %p101
      %p103 = scmp.ne.s32.totalorder %s95, %s98
      %p104 = scmp.eq.s32.totalorder %s24, 0
      %p105 = por %p103, %p104
      %p106 = scmp.ne.s32.totalorder %s95, %s98
      %p107 = scmp.eq.s32.totalorder %s29, 1
      %p108 = por %p106, %p107
      %p109 = scmp.ne.s32.totalorder %s98, %s99
      %p110 = scmp.eq.s32.totalorder %s29, 0
      %p111 = por %p109, %p110
      %p112 = scmp.ne.s32.totalorder %s98, %s99
      %p113 = scmp.eq.s32.totalorder %s30, 1
      %p114 = por %p112, %p113
      %p116 = scmp.ne.s32.totalorder %s99, %s115
      %p117 = scmp.eq.s32.totalorder %s30, 0
      %p118 = por %p116, %p117
      %s119 = ssub.s32 %s31, %s43
      %p120 = scmp.eq.s32.totalorder %s119, 0
      %s122 = sadd.s32 %s121, 1
      %s123 = scalar_select %p120, %s121, %s122
      %p126 = pneg %p120
      %p127 = scmp.eq.s32.totalorder %s24, 1
      %p128 = por %p126, %p127
      %p129 = scmp.ne.s32.totalorder %s121, %s124
      %p130 = scmp.eq.s32.totalorder %s24, 0
      %p131 = por %p129, %p130
      %p132 = scmp.ne.s32.totalorder %s121, %s124
      %p133 = scmp.eq.s32.totalorder %s29, 1
      %p134 = por %p132, %p133
      %p135 = scmp.ne.s32.totalorder %s124, %s125
      %p136 = scmp.eq.s32.totalorder %s29, 0
      %p137 = por %p135, %p136
      %p138 = scmp.ne.s32.totalorder %s124, %s125
      %p139 = scmp.eq.s32.totalorder %s30, 1
      %p140 = por %p138, %p139
      %p142 = scmp.ne.s32.totalorder %s125, %s141
      %p143 = scmp.eq.s32.totalorder %s30, 0
      %p144 = por %p142, %p143
      %s145 = ssub.s32 %s31, %s43
      %p146 = scmp.eq.s32.totalorder %s145, 0
      %s148 = sadd.s32 %s147, 1
      %s149 = scalar_select %p146, %s147, %s148
      %p152 = pneg %p146
      %p153 = scmp.eq.s32.totalorder %s24, 1
      %p154 = por %p152, %p153
      %p155 = scmp.ne.s32.totalorder %s147, %s150
      %p156 = scmp.eq.s32.totalorder %s24, 0
      %p157 = por %p155, %p156
      %p158 = scmp.ne.s32.totalorder %s147, %s150
      %p159 = scmp.eq.s32.totalorder %s29, 1
      %p160 = por %p158, %p159
      %p161 = scmp.ne.s32.totalorder %s150, %s151
      %p162 = scmp.eq.s32.totalorder %s29, 0
      %p163 = por %p161, %p162
      %p164 = scmp.ne.s32.totalorder %s150, %s151
      %p165 = scmp.eq.s32.totalorder %s30, 1
      %p166 = por %p164, %p165
      %p168 = scmp.ne.s32.totalorder %s151, %s167
      %p169 = scmp.eq.s32.totalorder %s30, 0
      %p170 = por %p168, %p169
      %s171 = ssub.s32 %s31, %s43
      %s172 = ssub.s32 %s32, %s39
      %s173 = sor.u32 %s171, %s172
      %p174 = scmp.eq.s32.totalorder %s173, 0
      %s176 = sadd.s32 %s175, 1
      %s177 = scalar_select %p174, %s175, %s176
      %p180 = pneg %p174
      %p181 = scmp.eq.s32.totalorder %s24, 1
      %p182 = por %p180, %p181
      %p183 = scmp.ne.s32.totalorder %s175, %s178
      %p184 = scmp.eq.s32.totalorder %s24, 0
      %p185 = por %p183, %p184
      %p186 = scmp.ne.s32.totalorder %s175, %s178
      %p187 = scmp.eq.s32.totalorder %s29, 1
      %p188 = por %p186, %p187
      %p189 = scmp.ne.s32.totalorder %s178, %s179
      %p190 = scmp.eq.s32.totalorder %s29, 0
      %p191 = por %p189, %p190
      %p192 = scmp.ne.s32.totalorder %s178, %s179
      %p193 = scmp.eq.s32.totalorder %s30, 1
      %p194 = por %p192, %p193
      %p196 = scmp.ne.s32.totalorder %s179, %s195
      %p197 = scmp.eq.s32.totalorder %s30, 0
      %p198 = por %p196, %p197
      %s199 = ssub.s32 %s31, %s43
      %s200 = ssub.s32 %s32, %s39
      %s201 = sor.u32 %s199, %s200
      %p202 = scmp.eq.s32.totalorder %s201, 0
      %s204 = sadd.s32 %s203, 1
      %s205 = scalar_select %p202, %s203, %s204
      %p208 = pneg %p202
      %p209 = scmp.eq.s32.totalorder %s24, 1
      %p210 = por %p208, %p209
      %p211 = scmp.ne.s32.totalorder %s203, %s206
      %p212 = scmp.eq.s32.totalorder %s24, 0
      %p213 = por %p211, %p212
      %p214 = scmp.ne.s32.totalorder %s203, %s206
      %p215 = scmp.eq.s32.totalorder %s29, 1
      %p216 = por %p214, %p215
      %p217 = scmp.ne.s32.totalorder %s206, %s207
      %p218 = scmp.eq.s32.totalorder %s29, 0
      %p219 = por %p217, %p218
      %p220 = scmp.ne.s32.totalorder %s206, %s207
      %p221 = scmp.eq.s32.totalorder %s30, 1
      %p222 = por %p220, %p221
      %p224 = scmp.ne.s32.totalorder %s207, %s223
      %p225 = scmp.eq.s32.totalorder %s30, 0
      %p226 = por %p224, %p225
      %s227 = ssub.s32 %s31, %s43
      %s228 = ssub.s32 %s32, %s39
      %s229 = sor.u32 %s227, %s228
      %p230 = scmp.eq.s32.totalorder %s229, 0
      %s232 = sadd.s32 %s231, 1
      %s233 = scalar_select %p230, %s231, %s232
      %p236 = pneg %p230
      %p237 = scmp.eq.s32.totalorder %s24, 1
      %p238 = por %p236, %p237
      %p239 = scmp.ne.s32.totalorder %s231, %s234
      %p240 = scmp.eq.s32.totalorder %s24, 0
      %p241 = por %p239, %p240
      %p242 = scmp.ne.s32.totalorder %s231, %s234
      %p243 = scmp.eq.s32.totalorder %s29, 1
      %p244 = por %p242, %p243
      %p245 = scmp.ne.s32.totalorder %s234, %s235
      %p246 = scmp.eq.s32.totalorder %s29, 0
      %p247 = por %p245, %p246
      %p248 = scmp.ne.s32.totalorder %s234, %s235
      %p249 = scmp.eq.s32.totalorder %s30, 1
      %p250 = por %p248, %p249
      %p252 = scmp.ne.s32.totalorder %s235, %s251
      %p253 = scmp.eq.s32.totalorder %s30, 0
      %p254 = por %p252, %p253
      %p255 = scmp.le.s32.totalorder 1, %s24
      %p256 = scmp.lt.s32.totalorder %s24, 3
      %p257 = pnand %p255, %p256
      %p258 = pneg %p257
      // Predicated region
      $region9: #{additive_mix.3} parent=5 // pred_check
        _
      $region10: #{additive_mix.3} parent=5 // pred_check_branch
        %260 = sbr.rel (%p257) target = $region12
      $region11: #{additive_mix.3} parent=5 // pred_region
        %s261 = ssub.s32 %s24, 1
        // Predicated region
        $region13: #{additive_mix.3} parent=11 // pred_check
          %p262 = pneg %p85
        $region14: #{additive_mix.3} parent=11 // pred_check_branch
          %264 = sbr.rel (%p262) target = $region16
        $region15: #{additive_mix.3} parent=11 // pred_region
          %s266 = ssub.s32 256, 256
          %267 = vsyncadd [#allocation6], %s266
          %s268 = sshll.u32 [#allocation5], 4
          %s269 = int_to_ptr.vmem [resolvable:$true] %s268
          %274 = dma.hbm_to_vmem [thread:$0]  %s1, 256, %s269, [#allocation6], 128, 128, 8
        $region16: #{additive_mix.3} parent=11 // pred_fallthru
          _
      $region12: #{additive_mix.3} parent=5 // pred_fallthru
        _
      %p275 = scmp.lt.s32.totalorder %s24, 2
      // Predicated region
      $region17: #{additive_mix.3} parent=5 // pred_check
        %p276 = pneg %p275
      $region18: #{additive_mix.3} parent=5 // pred_check_branch
        %278 = sbr.rel (%p276) target = $region20
      $region19: #{additive_mix.3} parent=5 // pred_region
        // Predicated region
        $region21: #{additive_mix.3} parent=19 // pred_check
          %p279 = pneg %p58
        $region22: #{additive_mix.3} parent=19 // pred_check_branch
          %281 = sbr.rel (%p279) target = $region24
        $region23: #{additive_mix.3} parent=19 // pred_region
          %s282 = sand.u32 %s24, 1
          %s283 = scalar_lea.sflag [#allocation3], %s282
          %s284 = sand.u32 %s48, 1
          %s285 = smul.addr %s284, 4
          %s286 = scalar_lea.vmem [#allocation2], %s285
          %s288 = ssub.s32 64, 64
          %289 = vsyncadd %s283, %s288
          %s290 = sadd.s32 %s32, %s31
          %s291 = smul.addr %s290, 64
          %s292 = scalar_lea.hbm %s0, %s291
          %s294 = sshll.u32 %s286, 4
          %s295 = int_to_ptr.vmem [resolvable:$true] %s294
          %297 = dma.hbm_to_vmem [thread:$0]  %s292, 64, %s295, %s283
        $region24: #{additive_mix.3} parent=19 // pred_fallthru
          _
        // Predicated region
        $region25: #{additive_mix.3} parent=19 // pred_check
          %p298 = pneg %p105
        $region26: #{additive_mix.3} parent=19 // pred_check_branch
          %300 = sbr.rel (%p298) target = $region28
        $region27: #{additive_mix.3} parent=19 // pred_region
          %s301 = sand.u32 %s24, 1
          %s302 = scalar_lea.sflag [#allocation3], %s301
          %s303 = sand.u32 %s95, 1
          %s304 = smul.addr %s303, 8
          %s305 = scalar_lea.vmem [#allocation7], %s304
          %s307 = ssub.s32 128, 128
          %308 = vsyncadd %s302, %s307
          %s309 = smul.addr %s31, 128
          %s310 = scalar_lea.hbm %s2, %s309
          %s312 = sshll.u32 %s305, 4
          %s313 = int_to_ptr.vmem [resolvable:$true] %s312
          %315 = dma.hbm_to_vmem [thread:$0]  %s310, 128, %s313, %s302
        $region28: #{additive_mix.3} parent=19 // pred_fallthru
          _
        // Predicated region
        $region29: #{additive_mix.3} parent=19 // pred_check
          %p316 = pneg %p131
        $region30: #{additive_mix.3} parent=19 // pred_check_branch
          %318 = sbr.rel (%p316) target = $region32
        $region31: #{additive_mix.3} parent=19 // pred_region
          %s319 = sand.u32 %s24, 1
          %s320 = scalar_lea.sflag [#allocation3], %s319
          %s321 = sand.u32 %s121, 1
          %s322 = smul.addr %s321, 8
          %s323 = scalar_lea.vmem [#allocation8], %s322
          %s325 = ssub.s32 128, 128
          %326 = vsyncadd %s320, %s325
          %s327 = smul.addr %s31, 128
          %s328 = scalar_lea.hbm %s3, %s327
          %s330 = sshll.u32 %s323, 4
          %s331 = int_to_ptr.vmem [resolvable:$true] %s330
          %333 = dma.hbm_to_vmem [thread:$0]  %s328, 128, %s331, %s320
        $region32: #{additive_mix.3} parent=19 // pred_fallthru
          _
        // Predicated region
        $region33: #{additive_mix.3} parent=19 // pred_check
          %p334 = pneg %p157
        $region34: #{additive_mix.3} parent=19 // pred_check_branch
          %336 = sbr.rel (%p334) target = $region36
        $region35: #{additive_mix.3} parent=19 // pred_region
          %s337 = sand.u32 %s24, 1
          %s338 = scalar_lea.sflag [#allocation3], %s337
          %s339 = sand.u32 %s147, 1
          %s340 = smul.addr %s339, 8
          %s341 = scalar_lea.vmem [#allocation9], %s340
          %s343 = ssub.s32 128, 128
          %344 = vsyncadd %s338, %s343
          %s345 = smul.addr %s31, 128
          %s346 = scalar_lea.hbm %s4, %s345
          %s348 = sshll.u32 %s341, 4
          %s349 = int_to_ptr.vmem [resolvable:$true] %s348
          %351 = dma.hbm_to_vmem [thread:$0]  %s346, 128, %s349, %s338
        $region36: #{additive_mix.3} parent=19 // pred_fallthru
          _
      $region20: #{additive_mix.3} parent=5 // pred_fallthru
        _
      %p352 = scmp.le.s32.totalorder 1, %s24
      %p353 = scmp.lt.s32.totalorder %s24, 3
      %p354 = pnand %p352, %p353
      %p355 = pneg %p354
      // Predicated region
      $region37: #{additive_mix.3} parent=5 // pred_check
        _
      $region38: #{additive_mix.3} parent=5 // pred_check_branch
        %357 = sbr.rel (%p354) target = $region40
      $region39: #{additive_mix.3} parent=5 // pred_region
        %s358 = ssub.s32 %s24, 1
        %s359 = sand.u32 %s29, 1
        %s360 = scalar_lea.sflag [#allocation3], %s359
        %s361 = sand.u32 %s51, 1
        %s362 = smul.addr %s361, 4
        %s363 = scalar_lea.vmem [#allocation2], %s362
        // Predicated region
        $region41: #{additive_mix.3} parent=39 // pred_check
          %p364 = pneg %p64
        $region42: #{additive_mix.3} parent=39 // pred_check_branch
          %366 = sbr.rel (%p364) target = $region44
        $region43: #{additive_mix.3} parent=39 // pred_region
          %367 = dma.done %s360, 64
        $region44: #{additive_mix.3} parent=39 // pred_fallthru
          _
        // Predicated region
        $region45: #{additive_mix.3} parent=39 // pred_check
          %p368 = pneg %p85
        $region46: #{additive_mix.3} parent=39 // pred_check_branch
          %370 = sbr.rel (%p368) target = $region48
        $region47: #{additive_mix.3} parent=39 // pred_region
          %371 = dma.done [#allocation6], 256
        $region48: #{additive_mix.3} parent=39 // pred_fallthru
          _
        %s372 = sand.u32 %s29, 1
        %s373 = scalar_lea.sflag [#allocation3], %s372
        %s374 = sand.u32 %s98, 1
        %s375 = smul.addr %s374, 8
        %s376 = scalar_lea.vmem [#allocation7], %s375
        // Predicated region
        $region49: #{additive_mix.3} parent=39 // pred_check
          %p377 = pneg %p111
        $region50: #{additive_mix.3} parent=39 // pred_check_branch
          %379 = sbr.rel (%p377) target = $region52
        $region51: #{additive_mix.3} parent=39 // pred_region
          %380 = dma.done %s373, 128
        $region52: #{additive_mix.3} parent=39 // pred_fallthru
          _
        %s381 = sand.u32 %s29, 1
        %s382 = scalar_lea.sflag [#allocation3], %s381
        %s383 = sand.u32 %s124, 1
        %s384 = smul.addr %s383, 8
        %s385 = scalar_lea.vmem [#allocation8], %s384
        // Predicated region
        $region53: #{additive_mix.3} parent=39 // pred_check
          %p386 = pneg %p137
        $region54: #{additive_mix.3} parent=39 // pred_check_branch
          %388 = sbr.rel (%p386) target = $region56
        $region55: #{additive_mix.3} parent=39 // pred_region
          %389 = dma.done %s382, 128
        $region56: #{additive_mix.3} parent=39 // pred_fallthru
          _
        %s390 = sand.u32 %s29, 1
        %s391 = scalar_lea.sflag [#allocation3], %s390
        %s392 = sand.u32 %s150, 1
        %s393 = smul.addr %s392, 8
        %s394 = scalar_lea.vmem [#allocation9], %s393
        // Predicated region
        $region57: #{additive_mix.3} parent=39 // pred_check
          %p395 = pneg %p163
        $region58: #{additive_mix.3} parent=39 // pred_check_branch
          %397 = sbr.rel (%p395) target = $region60
        $region59: #{additive_mix.3} parent=39 // pred_region
          %398 = dma.done %s391, 128
        $region60: #{additive_mix.3} parent=39 // pred_fallthru
          _
        %s399 = sand.u32 %s29, 1
        %s400 = scalar_lea.sflag [#allocation3], %s399
        %s401 = sand.u32 %s51, 1
        %s402 = smul.addr %s401, 4
        %s403 = scalar_lea.vmem [#allocation2], %s402
        %p404 = pneg %p64
        %p405 = pneg %p61
        %p406 = pneg %p85
        %p407 = pneg %p82
        %s408 = sand.u32 %s29, 1
        %s409 = scalar_lea.sflag [#allocation3], %s408
        %s410 = sand.u32 %s98, 1
        %s411 = smul.addr %s410, 8
        %s412 = scalar_lea.vmem [#allocation7], %s411
        %p413 = pneg %p111
        %p414 = pneg %p108
        %s415 = sand.u32 %s29, 1
        %s416 = scalar_lea.sflag [#allocation3], %s415
        %s417 = sand.u32 %s124, 1
        %s418 = smul.addr %s417, 8
        %s419 = scalar_lea.vmem [#allocation8], %s418
        %p420 = pneg %p137
        %p421 = pneg %p134
        %s422 = sand.u32 %s29, 1
        %s423 = scalar_lea.sflag [#allocation3], %s422
        %s424 = sand.u32 %s150, 1
        %s425 = smul.addr %s424, 8
        %s426 = scalar_lea.vmem [#allocation9], %s425
        %p427 = pneg %p163
        %p428 = pneg %p160
        %p429 = pneg %p191
        %p430 = pneg %p188
        %s431 = sand.u32 %s178, 1
        %s432 = scalar_lea.sflag [#allocation4], %s431
        %s433 = sand.u32 %s178, 1
        %s434 = smul.addr %s433, 8
        %s435 = scalar_lea.vmem [#allocation10], %s434
        %p436 = pneg %p219
        %p437 = pneg %p216
        %s438 = sand.u32 %s29, 1
        %s439 = scalar_lea.sflag [#allocation12], %s438
        %s440 = sand.u32 %s206, 1
        %s441 = smul.addr %s440, 8
        %s442 = scalar_lea.vmem [#allocation11], %s441
        %p443 = pneg %p247
        %p444 = pneg %p244
        %s445 = sand.u32 %s29, 1
        %s446 = scalar_lea.sflag [#allocation12], %s445
        %s447 = sand.u32 %s234, 1
        %s448 = smul.addr %s447, 8
        %s449 = scalar_lea.vmem [#allocation13], %s448
        %v450 = vld [vmem:[#allocation5] sm:$0xff]
        %v451 = vld [vmem:[#allocation5 + $0x8] sm:$0xff]
        %v452 = vld [vmem:[%s363] sm:$0xf]
        %vm453 = vcmask 31744
        %v455 = vsel %vm453, %v450, 0
        %v458 = vsel %vm453, %v451, 0
        %vm460 = vcmask 1043456
        %v462 = vsel %vm460, %v452, 0
        %464 = vmatprep.subr.mxu0 0.0
        %465 = vmatpush1.msra.mxu0 %v462
        %466 = vmatprep.subr.mxu0 0.0
        %467 = vmatpush1.msra.mxu0 0.0
        %468 = vmatprep.subr.mxu0 0.0
        %469 = vmatpush1.msra.mxu0 0.0
        %470 = vmatprep.subr.mxu0 0.0
        %471 = vmatpush1.msra.mxu0 0.0
        %472 = vmatprep.subr.mxu0 0.0
        %473 = vmatpush1.msra.mxu0 0.0
        %474 = vmatprep.subr.mxu0 0.0
        %475 = vmatpush1.msra.mxu0 0.0
        %476 = vmatprep.subr.mxu0 0.0
        %477 = vmatpush1.msra.mxu0 0.0
        %478 = vmatprep.subr.mxu0 0.0
        %479 = vmatpush1.msra.mxu0 0.0
        %480 = vmatprep.subr.mxu0 0.0
        %481 = vmatpush1.msra.mxu0 0.0
        %482 = vmatprep.subr.mxu0 0.0
        %483 = vmatpush1.msra.mxu0 0.0
        %484 = vmatprep.subr.mxu0 0.0
        %485 = vmatpush1.msra.mxu0 0.0
        %486 = vmatprep.subr.mxu0 0.0
        %487 = vmatpush1.msra.mxu0 0.0
        %488 = vmatprep.subr.mxu0 0.0
        %489 = vmatpush1.msra.mxu0 0.0
        %490 = vmatprep.subr.mxu0 0.0
        %491 = vmatpush1.msra.mxu0 0.0
        %492 = vmatprep.subr.mxu0 0.0
        %493 = vmatpush1.msra.mxu0 0.0
        %494 = vmatprep.subr.mxu0 0.0
        %495 = vmatpush1.msra.mxu0 0.0
        %496 = vmatprep.subr.mxu0 0.0
        %497 = vmatpush1.msra.mxu0 0.0
        %498 = vmatprep.subr.mxu0 0.0
        %499 = vmatpush1.msra.mxu0 0.0
        %500 = vmatprep.subr.mxu0 0.0
        %501 = vmatpush1.msra.mxu0 0.0
        %502 = vmatprep.subr.mxu0 0.0
        %503 = vmatpush1.msra.mxu0 0.0
        %504 = vmatprep.subr.mxu0 0.0
        %505 = vmatpush1.msra.mxu0 0.0
        %506 = vmatprep.subr.mxu0 0.0
        %507 = vmatpush1.msra.mxu0 0.0
        %508 = vmatprep.subr.mxu0 0.0
        %509 = vmatpush1.msra.mxu0 0.0
        %510 = vmatprep.subr.mxu0 0.0
        %511 = vmatpush1.msra.mxu0 0.0
        %512 = vmatprep.subr.mxu0 0.0
        %513 = vmatpush1.msra.mxu0 0.0
        %514 = vmatprep.subr.mxu0 0.0
        %515 = vmatpush1.msra.mxu0 0.0
        %516 = vmatprep.subr.mxu0 0.0
        %517 = vmatpush1.msra.mxu0 0.0
        %518 = vmatprep.subr.mxu0 0.0
        %519 = vmatpush1.msra.mxu0 0.0
        %520 = vmatprep.subr.mxu0 0.0
        %521 = vmatpush1.msra.mxu0 0.0
        %522 = vmatprep.subr.mxu0 0.0
        %523 = vmatpush1.msra.mxu0 0.0
        %524 = vmatprep.subr.mxu0 0.0
        %525 = vmatpush1.msra.mxu0 0.0
        %526 = vmatprep.subr.mxu0 0.0
        %527 = vmatpush1.msra.mxu0 0.0
        %528 = vmatprep.mubr.f32.mxu0 0.0
        %529 = vmatmul.mubr.f32.gmra.mrb[0].mxu0 %v455
        %v530 = vpop.f32.mrb[0].mxu0
        %v531 = vadd.f32 0.0, %v530
        %v532 = vpop.f32.mrb[0].mxu0
        %533 = vmatprep.mubr.f32.mxu0 0.0
        %534 = vmatmul.mubr.f32.gmra.mrb[0].mxu0 %v458
        %v535 = vpop.f32.mrb[0].mxu0
        %v536 = vadd.f32 0.0, %v535
        %v537 = vpop.f32.mrb[0].mxu0
        %538 = vdwg.mxu0
        %v539 = vld [vmem:[%s376] sm:$0xff]
        %v540 = vld [vmem:[%s385] sm:$0xff]
        %v541 = vld [vmem:[%s394] sm:$0xff]
        %543 = vset.pattern.permute.xlu0 0
        %544 = vperm.xlu0 %543, %v539
        %v545 = vpop.permute.xlu0 %544
        %v547 = vsub.f32 %v531, %v545
        %549 = vset.pattern.permute.xlu0 0
        %550 = vperm.xlu0 %549, %v540
        %v551 = vpop.permute.xlu0 %550
        %v553 = vsub.f32 %v536, %v551
        %555 = vset.pattern.permute.xlu0 0
        %556 = vperm.xlu0 %555, %v541
        %v557 = vpop.permute.xlu0 %556
        %v559 = vadd.f32 %v531, %v557
        %v560 = vsub.f32 %v559, %v553
        %v561 = vand.u32 2147483647, %v560
        %v562 = vmax.f32 %v559, %v553
        %v563 = vsub.f32 0.0, %v561
        %v564 = vmul.f32 %v563, 1.442695
        %v565 = vpow.pop %v564
        %v566 = vadd.f32 %v565, 1.0
        %v567 = vlog2.pop %v566
        %v568 = vmul.f32 %v567, 0.6931472
        %v569 = vadd.f32 %v562, %v568
        %vm570 = vcmask 130048
        %571 = vst.msk [vmem:[%s435] sm:$0xff] %vm570, %v547
        %572 = vst.msk [vmem:[%s442] sm:$0xff] %vm570, %v553
        %573 = vst.msk [vmem:[%s449] sm:$0xff] %vm570, %v569
        %s574 = sand.u32 %s178, 1
        %s575 = scalar_lea.sflag [#allocation4], %s574
        %s576 = sand.u32 %s178, 1
        %s577 = smul.addr %s576, 8
        %s578 = scalar_lea.vmem [#allocation10], %s577
        %s579 = sand.u32 %s29, 1
        %s580 = scalar_lea.sflag [#allocation12], %s579
        %s581 = sand.u32 %s206, 1
        %s582 = smul.addr %s581, 8
        %s583 = scalar_lea.vmem [#allocation11], %s582
        %s584 = sand.u32 %s29, 1
        %s585 = scalar_lea.sflag [#allocation12], %s584
        %s586 = sand.u32 %s234, 1
        %s587 = smul.addr %s586, 8
        %s588 = scalar_lea.vmem [#allocation13], %s587
        // Predicated region
        $region61: #{additive_mix.3} parent=39 // pred_check
          %p589 = pneg %p188
        $region62: #{additive_mix.3} parent=39 // pred_check_branch
          %591 = sbr.rel (%p589) target = $region64
        $region63: #{additive_mix.3} parent=39 // pred_region
          %s593 = ssub.s32 128, 64
          %594 = vsyncadd %s575, %s593
          %s595 = sadd.s32 %s34, %s33
          %s596 = smul.addr %s595, 64
          %s597 = scalar_lea.hbm %s5, %s596
          %s598 = sshll.u32 %s578, 4
          %s599 = int_to_ptr.vmem [resolvable:$true] %s598
          %604 = dma.vmem_to_hbm [thread:$0]  %s599, 64, %s597, %s575, 64, 64, 4
        $region64: #{additive_mix.3} parent=39 // pred_fallthru
          _
        // Predicated region
        $region65: #{additive_mix.3} parent=39 // pred_check
          %p605 = pneg %p216
        $region66: #{additive_mix.3} parent=39 // pred_check_branch
          %607 = sbr.rel (%p605) target = $region68
        $region67: #{additive_mix.3} parent=39 // pred_region
          %s609 = ssub.s32 128, 64
          %610 = vsyncadd %s580, %s609
          %s611 = sadd.s32 %s34, %s33
          %s612 = smul.addr %s611, 64
          %s613 = scalar_lea.hbm %s6, %s612
          %s614 = sshll.u32 %s583, 4
          %s615 = int_to_ptr.vmem [resolvable:$true] %s614
          %620 = dma.vmem_to_hbm [thread:$0]  %s615, 64, %s613, %s580, 64, 64, 4
        $region68: #{additive_mix.3} parent=39 // pred_fallthru
          _
        // Predicated region
        $region69: #{additive_mix.3} parent=39 // pred_check
          %p621 = pneg %p244
        $region70: #{additive_mix.3} parent=39 // pred_check_branch
          %623 = sbr.rel (%p621) target = $region72
        $region71: #{additive_mix.3} parent=39 // pred_region
          %s625 = ssub.s32 128, 64
          %626 = vsyncadd %s585, %s625
          %s627 = sadd.s32 %s34, %s33
          %s628 = smul.addr %s627, 64
          %s629 = scalar_lea.hbm %s7, %s628
          %s630 = sshll.u32 %s588, 4
          %s631 = int_to_ptr.vmem [resolvable:$true] %s630
          %636 = dma.vmem_to_hbm [thread:$0]  %s631, 64, %s629, %s585, 64, 64, 4
        $region72: #{additive_mix.3} parent=39 // pred_fallthru
          _
      $region40: #{additive_mix.3} parent=5 // pred_fallthru
        _
      %p637 = scmp.le.s32.totalorder 2, %s24
      // Predicated region
      $region73: #{additive_mix.3} parent=5 // pred_check
        %p638 = pneg %p637
      $region74: #{additive_mix.3} parent=5 // pred_check_branch
        %640 = sbr.rel (%p638) target = $region76
      $region75: #{additive_mix.3} parent=5 // pred_region
        %s641 = ssub.s32 %s24, 2
        // Predicated region
        $region77: #{additive_mix.3} parent=75 // pred_check
          %p642 = pneg %p194
        $region78: #{additive_mix.3} parent=75 // pred_check_branch
          %644 = sbr.rel (%p642) target = $region80
        $region79: #{additive_mix.3} parent=75 // pred_region
          %s645 = sand.u32 %s179, 1
          %s646 = scalar_lea.sflag [#allocation4], %s645
          %s647 = sand.u32 %s179, 1
          %s648 = smul.addr %s647, 8
          %s649 = scalar_lea.vmem [#allocation10], %s648
          %650 = dma.done %s646, 128
        $region80: #{additive_mix.3} parent=75 // pred_fallthru
          _
        // Predicated region
        $region81: #{additive_mix.3} parent=75 // pred_check
          %p651 = pneg %p222
        $region82: #{additive_mix.3} parent=75 // pred_check_branch
          %653 = sbr.rel (%p651) target = $region84
        $region83: #{additive_mix.3} parent=75 // pred_region
          %s654 = sand.u32 %s30, 1
          %s655 = scalar_lea.sflag [#allocation12], %s654
          %s656 = sand.u32 %s207, 1
          %s657 = smul.addr %s656, 8
          %s658 = scalar_lea.vmem [#allocation11], %s657
          %659 = dma.done %s655, 128
        $region84: #{additive_mix.3} parent=75 // pred_fallthru
          _
        // Predicated region
        $region85: #{additive_mix.3} parent=75 // pred_check
          %p660 = pneg %p250
        $region86: #{additive_mix.3} parent=75 // pred_check_branch
          %662 = sbr.rel (%p660) target = $region88
        $region87: #{additive_mix.3} parent=75 // pred_region
          %s663 = sand.u32 %s30, 1
          %s664 = scalar_lea.sflag [#allocation12], %s663
          %s665 = sand.u32 %s235, 1
          %s666 = smul.addr %s665, 8
          %s667 = scalar_lea.vmem [#allocation13], %s666
          %668 = dma.done %s664, 128
        $region88: #{additive_mix.3} parent=75 // pred_fallthru
          _
      $region76: #{additive_mix.3} parent=5 // pred_fallthru
        _
    $region6: #{additive_mix.3} parent=1 // loop_footer
      %s28 = sadd.s32 1, %s24
    $region7: #{additive_mix.3} parent=1 // loop_footer_branch
      %23 = sbr.rel target = $region3
    $region8: #{additive_mix.3} parent=1 // loop_exit
      _
    %669 = vsyncpa [#allocation3], 1
    %s670 = scalar_lea.sflag [#allocation3], 1
    %671 = vsyncpa %s670, 1
    %672 = vsyncpa [#allocation6], 1
    %673 = vsyncpa [#allocation4], 1
    %s674 = scalar_lea.sflag [#allocation4], 1
    %675 = vsyncpa %s674, 1
    %676 = vsyncpa [#allocation12], 1
    %s677 = scalar_lea.sflag [#allocation12], 1
    %678 = vsyncpa %s677, 1

</llo_original>
